<compile_context>
chip_gen: v7x
topology: tpu7x:2x2x1
jax: 0.10.0
libtpu: 0.0.40
codegen_flags: <defaults>
</compile_context>

<pallas_src>
import numpy as np

import jax
import jax.numpy as jnp
from jax import lax
from jax.experimental import pallas as pl
from jax.experimental.pallas import tpu as pltpu


def _conv3x3_bn_relu_kernel(x_ref, w_ref, b_ref, o_ref, xpad_ref, patch_ref):
    """One batch image per grid step.

    x_ref:     (1, H, W, Cin)   unpadded NHWC activation tile (bf16)
    w_ref:     (Cout, 9*Cin)    BN-folded conv weights, resident in VMEM (bf16)
    b_ref:     (Cout, 1)        BN-folded bias (f32)
    o_ref:     (1, Cout, H*W)   output, channels-major & lane-dense
    xpad_ref:  (H+2, W+2, Cin)  VMEM scratch: zero-padded copy of the image
    patch_ref: (H, W, 9*Cin)    VMEM scratch: im2col patch matrix
    """
    _, h, w, cin = x_ref.shape
    hw = h * w
    k9 = patch_ref.shape[-1]          # 9 * Cin

    # In-kernel "same" padding: zero the halo scratch, copy the interior.
    # (Re-zeroed every grid step: with a "parallel" grid each megacore slice
    #  must see a clean halo; the buffer is tiny so this is cheap.)
    xpad_ref[...] = jnp.zeros(xpad_ref.shape, xpad_ref.dtype)
    xpad_ref[1:1 + h, 1:1 + w, :] = x_ref[0]

    # im2col ONCE: patch[y, x, t*Cin:(t+1)*Cin] = xpad[y+kh, x+kw, :], t = 3*kh+kw.
    # Pure (masked) copies into one VMEM buffer; no per-tap accumulator passes.
    for kh in range(3):
        for kw in range(3):
            t = 3 * kh + kw
            patch_ref[:, :, t * cin:(t + 1) * cin] = \
                xpad_ref[kh:kh + h, kw:kw + w, :]

    # Single big-K contraction on the MXU:
    #   (Cout, 9Cin) x (HW, 9Cin)^T -> (Cout, HW), f32 accumulation.
    patch = patch_ref[...].reshape(hw, k9)   # collapse (H, W) rows; lanes unchanged
    acc = lax.dot_general(w_ref[...], patch,
                          dimension_numbers=(((1,), (1,)), ((), ())),
                          preferred_element_type=jnp.float32)

    # Folded-BN bias + ReLU epilogue in f32, lane-dense store.
    o_ref[0] = jnp.maximum(acc + b_ref[...], 0.0).astype(o_ref.dtype)


def conv_layer_forward(x_nchw, conv_weight_oihw, bn_gamma, bn_beta, bn_mean,
                       bn_var, *, eps=1e-5, compute_dtype=jnp.bfloat16):
    """ConvLayer forward: Conv2d(3x3,s=1,p=1,bias=False) -> BatchNorm2d(eval) -> ReLU.

    Input/output are NCHW to match the PyTorch module; Dropout2d(p=0) is identity.
    """
    n, cin, h, w = x_nchw.shape
    cout = conv_weight_oihw.shape[0]
    assert conv_weight_oihw.shape == (cout, cin, 3, 3), "expects 3x3 conv weights"

    # ---- fold eval-mode BatchNorm into the conv (trace-time, tiny) ----------
    scale = bn_gamma * lax.rsqrt(bn_var + eps)                       # (Cout,)
    bias = bn_beta - bn_mean * scale                                 # (Cout,)
    # OIHW -> (Cout, kh, kw, Cin), scale per output channel, flatten taps so
    # column (3*kh + kw)*Cin + ci matches the kernel's im2col patch layout.
    w_folded = (jnp.transpose(conv_weight_oihw, (0, 2, 3, 1))
                * scale[:, None, None, None]).reshape(cout, 9 * cin)
    w_folded = w_folded.astype(compute_dtype)
    b_col = bias.reshape(cout, 1).astype(jnp.float32)

    # ---- NCHW -> NHWC + bf16 cast (one fused XLA pass); NO jnp.pad round trip.
    x_nhwc = jnp.transpose(x_nchw, (0, 2, 3, 1)).astype(compute_dtype)

    hw = h * w   # 256 here -> lane-dense (multiple of 128) output stores

    # ---- VMEM budget: streamed input/output double-buffers + resident weights
    #      + the two in-kernel scratches, sized against the chip's capacity.
    bpe = np.dtype(compute_dtype).itemsize
    vmem_need = (2 * h * w * cin * bpe                 # input tile, double-buffered
                 + 2 * cout * hw * 4                   # f32 output tile, double-buffered
                 + cout * 9 * cin * bpe + cout * 4     # resident weights + bias (single)
                 + (h + 2) * (w + 2) * cin * bpe       # zero-padded image scratch
                 + h * w * 9 * cin * bpe)              # im2col patch scratch
    try:
        vmem_cap = int(pltpu.get_tpu_info().vmem_capacity_bytes)  # 128 MiB v5e/v6e, 64 MiB v7x
    except Exception:
        vmem_cap = 64 * 1024 * 1024
    vmem_limit = int(min(max(2 * vmem_need, 16 * 1024 * 1024), (3 * vmem_cap) // 4))
    if vmem_need > vmem_limit:
        raise ValueError(
            f"ConvLayer Pallas kernel: one image needs ~{vmem_need} B of VMEM "
            f"(> budget {vmem_limit} B); this feature-map size requires the "
            "H-tiled variant (see TODO).")

    out_flat = pl.pallas_call(
        _conv3x3_bn_relu_kernel,
        out_shape=jax.ShapeDtypeStruct((n, cout, hw), jnp.float32),
        grid_spec=pltpu.PrefetchScalarGridSpec(
            num_scalar_prefetch=0,
            grid=(n,),                                                   # one image/step
            in_specs=[
                pl.BlockSpec((1, h, w, cin), lambda i: (i, 0, 0, 0)),    # streamed x
                pl.BlockSpec(memory_space=pltpu.MemorySpace.VMEM),       # resident W
                pl.BlockSpec(memory_space=pltpu.MemorySpace.VMEM),       # resident bias
            ],
            out_specs=pl.BlockSpec((1, cout, hw), lambda i: (i, 0, 0)),
            scratch_shapes=[
                pltpu.VMEM((h + 2, w + 2, cin), compute_dtype),   # zero-padded image
                pltpu.VMEM((h, w, 9 * cin), compute_dtype),       # im2col patch
            ],
        ),
        compiler_params=pltpu.CompilerParams(
            dimension_semantics=("parallel",),
            vmem_limit_bytes=vmem_limit),
    )(x_nhwc, w_folded, b_col)

    # (N, Cout, H*W) -> NCHW is a pure reshape: no transpose, no extra HBM pass.
    return out_flat.reshape(n, cout, h, w)


def _reference(x_nchw, w_oihw, gamma, beta, mean, var, eps=1e-5):
    """Independent pure-JAX reference: XLA conv + (unfolded) BN + ReLU, all f32."""
    y = lax.conv_general_dilated(
        x_nchw.astype(jnp.float32), w_oihw.astype(jnp.float32),
        window_strides=(1, 1), padding=((1, 1), (1, 1)),
        dimension_numbers=("NCHW", "OIHW", "NCHW"),
        precision=lax.Precision.HIGHEST)
    inv = lax.rsqrt(var + eps)
    y = (y - mean[None, :, None, None]) * (gamma * inv)[None, :, None, None] \
        + beta[None, :, None, None]
    return jnp.maximum(y, 0.0)


if __name__ == "__main__":
    key = jax.random.PRNGKey(0)
    k_x, k_w, k_g, k_b, k_m, k_v = jax.random.split(key, 6)

    N, Cin, H, W = 2, 4, 16, 16
    Cout = 8

    x = jax.random.normal(k_x, (N, Cin, H, W), dtype=jnp.float32)
    # Conv2d weight in the PyTorch OIHW layout (bias=False per module default).
    w_conv = jax.random.normal(k_w, (Cout, Cin, 3, 3), dtype=jnp.float32) * 0.1
    # BatchNorm2d (eval-mode) parameters / running statistics.
    gamma = 1.0 + 0.1 * jax.random.normal(k_g, (Cout,), dtype=jnp.float32)
    beta = 0.1 * jax.random.normal(k_b, (Cout,), dtype=jnp.float32)
    run_mean = 0.1 * jax.random.normal(k_m, (Cout,), dtype=jnp.float32)
    run_var = jax.random.uniform(k_v, (Cout,), dtype=jnp.float32,
                                 minval=0.5, maxval=1.5)

    out = jax.jit(conv_layer_forward)(x, w_conv, gamma, beta, run_mean, run_var)
    out = jax.block_until_ready(out)
    ref = _reference(x, w_conv, gamma, beta, run_mean, run_var)

    assert out.shape == (N, Cout, H, W)
    max_err = float(jnp.max(jnp.abs(out - ref)))
    # Tolerance documents the bf16 MXU operands (~2^-9 relative rounding on each
    # activation/weight); accumulation and the BN/ReLU epilogue are exact f32.
    assert jnp.allclose(out, ref, atol=2e-2, rtol=2e-2), max_err

    print("KERNEL_OK")
</pallas_src>

<mosaic_0001>
module attributes {stable_mosaic.version = 11 : i64} {
  func.func @_conv3x3_bn_relu_kernel(%arg0: i32, %arg1: memref<1x16x16x4xbf16, #tpu.memory_space<vmem>>, %arg2: memref<8x36xbf16, #tpu.memory_space<vmem>>, %arg3: memref<8x1xf32, #tpu.memory_space<vmem>>, %arg4: memref<1x8x256xf32, #tpu.memory_space<vmem>>, %arg5: memref<18x18x4xbf16, #tpu.memory_space<vmem>>, %arg6: memref<16x16x36xbf16, #tpu.memory_space<vmem>>) attributes {dimension_semantics = [#tpu.dimension_semantics<parallel>], iteration_bounds = array<i64: 2>, scalar_prefetch = 0 : i64, scratch_operands = 2 : i64, tpu.core_type = #tpu.core_type<tc>, window_params = [{transform_indices = @transform_0, window_bounds = array<i64: 1, 16, 16, 4>}, {pipeline_mode = #tpu.pipeline_mode<synchronous>, transform_indices = @transform_1, window_bounds = array<i64: 8, 36>}, {pipeline_mode = #tpu.pipeline_mode<synchronous>, transform_indices = @transform_2, window_bounds = array<i64: 8, 1>}, {transform_indices = @transform_3, window_bounds = array<i64: 1, 8, 256>}]} {
    %cst = arith.constant 0.000000e+00 : bf16
    %0 = vector.broadcast %cst : bf16 to vector<18x18x4xbf16>
    %c0 = arith.constant 0 : index
    %c0_0 = arith.constant 0 : index
    %c0_1 = arith.constant 0 : index
    %1 = vector.load %arg5[%c0, %c0_0, %c0_1] : memref<18x18x4xbf16, #tpu.memory_space<vmem>>, vector<18x18x4xbf16>
    tpu.vector_store %arg5[%c0, %c0_0, %c0_1], %0 {strides = array<i32>} : memref<18x18x4xbf16, #tpu.memory_space<vmem>>, vector<18x18x4xbf16>,
    %c0_2 = arith.constant 0 : index
    %c0_3 = arith.constant 0 : index
    %c0_4 = arith.constant 0 : index
    %c0_5 = arith.constant 0 : index
    %2 = vector.load %arg1[%c0_2, %c0_3, %c0_4, %c0_5] : memref<1x16x16x4xbf16, #tpu.memory_space<vmem>>, vector<1x16x16x4xbf16>
    %3 = vector.shape_cast %2 : vector<1x16x16x4xbf16> to vector<16x16x4xbf16>
    %c1 = arith.constant 1 : index
    %c1_6 = arith.constant 1 : index
    %c0_7 = arith.constant 0 : index
    %4 = vector.load %arg5[%c1, %c1_6, %c0_7] : memref<18x18x4xbf16, #tpu.memory_space<vmem>>, vector<16x16x4xbf16>
    tpu.vector_store %arg5[%c1, %c1_6, %c0_7], %3 {strides = array<i32>} : memref<18x18x4xbf16, #tpu.memory_space<vmem>>, vector<16x16x4xbf16>,
    %c0_8 = arith.constant 0 : index
    %c0_9 = arith.constant 0 : index
    %c0_10 = arith.constant 0 : index
    %5 = vector.load %arg5[%c0_8, %c0_9, %c0_10] : memref<18x18x4xbf16, #tpu.memory_space<vmem>>, vector<16x16x4xbf16>
    %c0_11 = arith.constant 0 : index
    %c0_12 = arith.constant 0 : index
    %c0_13 = arith.constant 0 : index
    %6 = vector.load %arg6[%c0_11, %c0_12, %c0_13] : memref<16x16x36xbf16, #tpu.memory_space<vmem>>, vector<16x16x4xbf16>
    tpu.vector_store %arg6[%c0_11, %c0_12, %c0_13], %5 {strides = array<i32>} : memref<16x16x36xbf16, #tpu.memory_space<vmem>>, vector<16x16x4xbf16>,
    %c0_14 = arith.constant 0 : index
    %c1_15 = arith.constant 1 : index
    %c0_16 = arith.constant 0 : index
    %7 = vector.load %arg5[%c0_14, %c1_15, %c0_16] : memref<18x18x4xbf16, #tpu.memory_space<vmem>>, vector<16x16x4xbf16>
    %c0_17 = arith.constant 0 : index
    %c0_18 = arith.constant 0 : index
    %c4 = arith.constant 4 : index
    %8 = vector.load %arg6[%c0_17, %c0_18, %c4] : memref<16x16x36xbf16, #tpu.memory_space<vmem>>, vector<16x16x4xbf16>
    tpu.vector_store %arg6[%c0_17, %c0_18, %c4], %7 {strides = array<i32>} : memref<16x16x36xbf16, #tpu.memory_space<vmem>>, vector<16x16x4xbf16>,
    %c0_19 = arith.constant 0 : index
    %c2 = arith.constant 2 : index
    %c0_20 = arith.constant 0 : index
    %9 = vector.load %arg5[%c0_19, %c2, %c0_20] : memref<18x18x4xbf16, #tpu.memory_space<vmem>>, vector<16x16x4xbf16>
    %c0_21 = arith.constant 0 : index
    %c0_22 = arith.constant 0 : index
    %c8 = arith.constant 8 : index
    %10 = vector.load %arg6[%c0_21, %c0_22, %c8] : memref<16x16x36xbf16, #tpu.memory_space<vmem>>, vector<16x16x4xbf16>
    tpu.vector_store %arg6[%c0_21, %c0_22, %c8], %9 {strides = array<i32>} : memref<16x16x36xbf16, #tpu.memory_space<vmem>>, vector<16x16x4xbf16>,
    %c1_23 = arith.constant 1 : index
    %c0_24 = arith.constant 0 : index
    %c0_25 = arith.constant 0 : index
    %11 = vector.load %arg5[%c1_23, %c0_24, %c0_25] : memref<18x18x4xbf16, #tpu.memory_space<vmem>>, vector<16x16x4xbf16>
    %c0_26 = arith.constant 0 : index
    %c0_27 = arith.constant 0 : index
    %c12 = arith.constant 12 : index
    %12 = vector.load %arg6[%c0_26, %c0_27, %c12] : memref<16x16x36xbf16, #tpu.memory_space<vmem>>, vector<16x16x4xbf16>
    tpu.vector_store %arg6[%c0_26, %c0_27, %c12], %11 {strides = array<i32>} : memref<16x16x36xbf16, #tpu.memory_space<vmem>>, vector<16x16x4xbf16>,
    %c1_28 = arith.constant 1 : index
    %c1_29 = arith.constant 1 : index
    %c0_30 = arith.constant 0 : index
    %13 = vector.load %arg5[%c1_28, %c1_29, %c0_30] : memref<18x18x4xbf16, #tpu.memory_space<vmem>>, vector<16x16x4xbf16>
    %c0_31 = arith.constant 0 : index
    %c0_32 = arith.constant 0 : index
    %c16 = arith.constant 16 : index
    %14 = vector.load %arg6[%c0_31, %c0_32, %c16] : memref<16x16x36xbf16, #tpu.memory_space<vmem>>, vector<16x16x4xbf16>
    tpu.vector_store %arg6[%c0_31, %c0_32, %c16], %13 {strides = array<i32>} : memref<16x16x36xbf16, #tpu.memory_space<vmem>>, vector<16x16x4xbf16>,
    %c1_33 = arith.constant 1 : index
    %c2_34 = arith.constant 2 : index
    %c0_35 = arith.constant 0 : index
    %15 = vector.load %arg5[%c1_33, %c2_34, %c0_35] : memref<18x18x4xbf16, #tpu.memory_space<vmem>>, vector<16x16x4xbf16>
    %c0_36 = arith.constant 0 : index
    %c0_37 = arith.constant 0 : index
    %c20 = arith.constant 20 : index
    %16 = vector.load %arg6[%c0_36, %c0_37, %c20] : memref<16x16x36xbf16, #tpu.memory_space<vmem>>, vector<16x16x4xbf16>
    tpu.vector_store %arg6[%c0_36, %c0_37, %c20], %15 {strides = array<i32>} : memref<16x16x36xbf16, #tpu.memory_space<vmem>>, vector<16x16x4xbf16>,
    %c2_38 = arith.constant 2 : index
    %c0_39 = arith.constant 0 : index
    %c0_40 = arith.constant 0 : index
    %17 = vector.load %arg5[%c2_38, %c0_39, %c0_40] : memref<18x18x4xbf16, #tpu.memory_space<vmem>>, vector<16x16x4xbf16>
    %c0_41 = arith.constant 0 : index
    %c0_42 = arith.constant 0 : index
    %c24 = arith.constant 24 : index
    %18 = vector.load %arg6[%c0_41, %c0_42, %c24] : memref<16x16x36xbf16, #tpu.memory_space<vmem>>, vector<16x16x4xbf16>
    tpu.vector_store %arg6[%c0_41, %c0_42, %c24], %17 {strides = array<i32>} : memref<16x16x36xbf16, #tpu.memory_space<vmem>>, vector<16x16x4xbf16>,
    %c2_43 = arith.constant 2 : index
    %c1_44 = arith.constant 1 : index
    %c0_45 = arith.constant 0 : index
    %19 = vector.load %arg5[%c2_43, %c1_44, %c0_45] : memref<18x18x4xbf16, #tpu.memory_space<vmem>>, vector<16x16x4xbf16>
    %c0_46 = arith.constant 0 : index
    %c0_47 = arith.constant 0 : index
    %c28 = arith.constant 28 : index
    %20 = vector.load %arg6[%c0_46, %c0_47, %c28] : memref<16x16x36xbf16, #tpu.memory_space<vmem>>, vector<16x16x4xbf16>
    tpu.vector_store %arg6[%c0_46, %c0_47, %c28], %19 {strides = array<i32>} : memref<16x16x36xbf16, #tpu.memory_space<vmem>>, vector<16x16x4xbf16>,
    %c2_48 = arith.constant 2 : index
    %c2_49 = arith.constant 2 : index
    %c0_50 = arith.constant 0 : index
    %21 = vector.load %arg5[%c2_48, %c2_49, %c0_50] : memref<18x18x4xbf16, #tpu.memory_space<vmem>>, vector<16x16x4xbf16>
    %c0_51 = arith.constant 0 : index
    %c0_52 = arith.constant 0 : index
    %c32 = arith.constant 32 : index
    %22 = vector.load %arg6[%c0_51, %c0_52, %c32] : memref<16x16x36xbf16, #tpu.memory_space<vmem>>, vector<16x16x4xbf16>
    tpu.vector_store %arg6[%c0_51, %c0_52, %c32], %21 {strides = array<i32>} : memref<16x16x36xbf16, #tpu.memory_space<vmem>>, vector<16x16x4xbf16>,
    %c0_53 = arith.constant 0 : index
    %c0_54 = arith.constant 0 : index
    %c0_55 = arith.constant 0 : index
    %23 = vector.load %arg6[%c0_53, %c0_54, %c0_55] : memref<16x16x36xbf16, #tpu.memory_space<vmem>>, vector<16x16x36xbf16>
    %24 = vector.shape_cast %23 : vector<16x16x36xbf16> to vector<256x36xbf16>
    %c0_56 = arith.constant 0 : index
    %c0_57 = arith.constant 0 : index
    %25 = vector.load %arg2[%c0_56, %c0_57] : memref<8x36xbf16, #tpu.memory_space<vmem>>, vector<8x36xbf16>
    %cst_58 = arith.constant dense<0.000000e+00> : vector<8x256xf32>
    %26 = tpu.matmul %25, %24, %cst_58 {dimension_numbers = #tpu.dot_dimension_numbers<[1], [1], [0], [0], [0, 0, 1, 0], [], []>} : vector<8x36xbf16>, vector<256x36xbf16>, vector<8x256xf32> -> vector<8x256xf32>
    %c0_59 = arith.constant 0 : index
    %c0_60 = arith.constant 0 : index
    %27 = vector.load %arg3[%c0_59, %c0_60] : memref<8x1xf32, #tpu.memory_space<vmem>>, vector<8x1xf32>
    %28 = vector.broadcast %27 : vector<8x1xf32> to vector<8x256xf32>
    %29 = arith.addf %26, %28 : vector<8x256xf32>
    %cst_61 = arith.constant 0.000000e+00 : f32
    %30 = vector.broadcast %cst_61 : f32 to vector<8x256xf32>
    %31 = arith.maximumf %29, %30 : vector<8x256xf32>
    %c0_62 = arith.constant 0 : index
    %c0_63 = arith.constant 0 : index
    %c0_64 = arith.constant 0 : index
    %32 = vector.load %arg4[%c0_62, %c0_63, %c0_64] : memref<1x8x256xf32, #tpu.memory_space<vmem>>, vector<1x8x256xf32>
    %33 = vector.shape_cast %32 : vector<1x8x256xf32> to vector<8x256xf32>
    %34 = vector.shape_cast %31 : vector<8x256xf32> to vector<1x8x256xf32>
    tpu.vector_store %arg4[%c0_62, %c0_63, %c0_64], %34 {strides = array<i32>} : memref<1x8x256xf32, #tpu.memory_space<vmem>>, vector<1x8x256xf32>,
    return
  }
  func.func @transform_0(%arg0: i32) -> (i32, i32, i32, i32) {
    %c0_i32 = arith.constant 0 : i32
    %c0_i32_0 = arith.constant 0 : i32
    %c0_i32_1 = arith.constant 0 : i32
    %c0_i32_2 = arith.constant 0 : i32
    return %arg0, %c0_i32, %c0_i32_0, %c0_i32_1 : i32, i32, i32, i32
  }
  func.func @transform_1(%arg0: i32) -> (i32, i32) {
    %c0_i32 = arith.constant 0 : i32
    %c0_i32_0 = arith.constant 0 : i32
    %c0_i32_1 = arith.constant 0 : i32
    return %c0_i32, %c0_i32_0 : i32, i32
  }
  func.func @transform_2(%arg0: i32) -> (i32, i32) {
    %c0_i32 = arith.constant 0 : i32
    %c0_i32_0 = arith.constant 0 : i32
    %c0_i32_1 = arith.constant 0 : i32
    return %c0_i32, %c0_i32_0 : i32, i32
  }
  func.func @transform_3(%arg0: i32) -> (i32, i32, i32) {
    %c0_i32 = arith.constant 0 : i32
    %c0_i32_0 = arith.constant 0 : i32
    %c0_i32_1 = arith.constant 0 : i32
    return %arg0, %c0_i32, %c0_i32_0 : i32, i32, i32
  }
}

</mosaic_0001>

<llo_original>
// kernel: conv_layer_forward.1
$region0: #{conv_layer_forward.1}
  #allocation0 [shape = 'u32[]', space=smem, size = 0x4, offset = 0x4, fixed_abs, tag = 'smem constant byte address 0x4 - core index']
  #allocation1 [shape = 'u32[144,128]{1,0:T(1,128)}', space=vmem, size = 0x12000, scoped, tag = 'internal scratch']
  #allocation2 [shape = 'bf16[18,18,4]{2,1,0:T(8,128)(2,1)}', space=vmem, size = 0x1b000, scoped, tag = 'scratch operand']
  #allocation3 [shape = 'bf16[16,16,36]{2,1,0:T(16,128)(2,1)}', space=vmem, size = 0x10000, scoped, tag = 'scratch operand']
  %s0 = inlined_call_operand.vmem [shape: bf16[2,16,16,4], index: 0, kind: input, shape index: {}]
  %s1 = inlined_call_operand.vmem [shape: bf16[8,36], index: 1, kind: input, shape index: {}]
  %s2 = inlined_call_operand.vmem [shape: f32[8,1], index: 2, kind: input, shape index: {}]
  %s3 = inlined_call_operand.vmem [shape: f32[2,8,256], index: 3, kind: output, shape index: {}]
  %s4 = sld [smem:[#allocation0]]
  $region45: #{conv_layer_forward.1} parent=0
    _
  %s6 = ssub.s32 1, %s4
  %s7 = scalar_select 0, %s6, %s4
  loop: start=0, step=1, limit=4
  $region2: #{conv_layer_forward.1} parent=0 // loop_pre_header
    _
  $region3: #{conv_layer_forward.1} parent=0 // loop_header
    %s9 = sphi 0, %s13
    %p10 = scmp.ge.s32.totalorder %s9, 4
    %s19 = sphi 0, %s21
    %s22 = sphi 0, %s19
    %s23 = sphi 0, %s22
    %s39 = sphi 0, %s23
    %s43 = sphi 0, %s43
    %s45 = sphi 0, %s43
    %s46 = sphi 0, %s45
    %s60 = sphi 0, %s46
    %s64 = sphi 0, %s64
    %s66 = sphi 0, %s64
    %s67 = sphi 0, %s66
    %s81 = sphi 0, %s67
    %s87 = sphi 0, %s89
    %s90 = sphi 0, %s87
    %s91 = sphi 0, %s90
    %s107 = sphi 0, %s91
  $region4: #{conv_layer_forward.1} parent=0 // loop_header_branch
    %12 = sbr.rel (%p10) target = $region8
  $region5: #{conv_layer_forward.1} parent=0 // loop_body
    %s14 = ssub.s32 %s9, 1
    %s15 = ssub.s32 %s9, 2
    %s16 = sadd.s32 %s9, 1
    %s17 = ssub.s32 %s9, %s16
    %p18 = scmp.eq.s32.totalorder %s17, 0
    %s20 = sadd.s32 %s19, 1
    %s21 = scalar_select %p18, %s19, %s20
    %p24 = pneg %p18
    %p25 = scmp.eq.s32.totalorder %s9, 1
    %p26 = por %p24, %p25
    %p27 = scmp.ne.s32.totalorder %s19, %s22
    %p28 = scmp.eq.s32.totalorder %s9, 0
    %p29 = por %p27, %p28
    %p30 = scmp.ne.s32.totalorder %s19, %s22
    %p31 = scmp.eq.s32.totalorder %s14, 1
    %p32 = por %p30, %p31
    %p33 = scmp.ne.s32.totalorder %s22, %s23
    %p34 = scmp.eq.s32.totalorder %s14, 0
    %p35 = por %p33, %p34
    %p36 = scmp.ne.s32.totalorder %s22, %s23
    %p37 = scmp.eq.s32.totalorder %s15, 1
    %p38 = por %p36, %p37
    %p40 = scmp.ne.s32.totalorder %s23, %s39
    %p41 = scmp.eq.s32.totalorder %s15, 0
    %p42 = por %p40, %p41
    %s44 = sadd.s32 %s43, 1
    %p47 = scmp.eq.s32.totalorder %s9, 1
    %p48 = scmp.ne.s32.totalorder %s43, %s45
    %p49 = scmp.eq.s32.totalorder %s9, 0
    %p50 = por %p48, %p49
    %p51 = scmp.ne.s32.totalorder %s43, %s45
    %p52 = scmp.eq.s32.totalorder %s14, 1
    %p53 = por %p51, %p52
    %p54 = scmp.ne.s32.totalorder %s45, %s46
    %p55 = scmp.eq.s32.totalorder %s14, 0
    %p56 = por %p54, %p55
    %p57 = scmp.ne.s32.totalorder %s45, %s46
    %p58 = scmp.eq.s32.totalorder %s15, 1
    %p59 = por %p57, %p58
    %p61 = scmp.ne.s32.totalorder %s46, %s60
    %p62 = scmp.eq.s32.totalorder %s15, 0
    %p63 = por %p61, %p62
    %s65 = sadd.s32 %s64, 1
    %p68 = scmp.eq.s32.totalorder %s9, 1
    %p69 = scmp.ne.s32.totalorder %s64, %s66
    %p70 = scmp.eq.s32.totalorder %s9, 0
    %p71 = por %p69, %p70
    %p72 = scmp.ne.s32.totalorder %s64, %s66
    %p73 = scmp.eq.s32.totalorder %s14, 1
    %p74 = por %p72, %p73
    %p75 = scmp.ne.s32.totalorder %s66, %s67
    %p76 = scmp.eq.s32.totalorder %s14, 0
    %p77 = por %p75, %p76
    %p78 = scmp.ne.s32.totalorder %s66, %s67
    %p79 = scmp.eq.s32.totalorder %s15, 1
    %p80 = por %p78, %p79
    %p82 = scmp.ne.s32.totalorder %s67, %s81
    %p83 = scmp.eq.s32.totalorder %s15, 0
    %p84 = por %p82, %p83
    %s85 = ssub.s32 %s9, %s16
    %p86 = scmp.eq.s32.totalorder %s85, 0
    %s88 = sadd.s32 %s87, 1
    %s89 = scalar_select %p86, %s87, %s88
    %p92 = pneg %p86
    %p93 = scmp.eq.s32.totalorder %s9, 1
    %p94 = por %p92, %p93
    %p95 = scmp.ne.s32.totalorder %s87, %s90
    %p96 = scmp.eq.s32.totalorder %s9, 0
    %p97 = por %p95, %p96
    %p98 = scmp.ne.s32.totalorder %s87, %s90
    %p99 = scmp.eq.s32.totalorder %s14, 1
    %p100 = por %p98, %p99
    %p101 = scmp.ne.s32.totalorder %s90, %s91
    %p102 = scmp.eq.s32.totalorder %s14, 0
    %p103 = por %p101, %p102
    %p104 = scmp.ne.s32.totalorder %s90, %s91
    %p105 = scmp.eq.s32.totalorder %s15, 1
    %p106 = por %p104, %p105
    %p108 = scmp.ne.s32.totalorder %s91, %s107
    %p109 = scmp.eq.s32.totalorder %s15, 0
    %p110 = por %p108, %p109
    %p111 = scmp.le.s32.totalorder 1, %s9
    %p112 = scmp.lt.s32.totalorder %s9, 3
    %p113 = pnand %p111, %p112
    %p114 = pneg %p113
    // Predicated region
    $region9: #{conv_layer_forward.1} parent=5 // pred_check
      _
    $region10: #{conv_layer_forward.1} parent=5 // pred_check_branch
      %116 = sbr.rel (%p113) target = $region12
    $region11: #{conv_layer_forward.1} parent=5 // pred_region
      %s117 = ssub.s32 %s9, 1
      // Predicated region
      $region13: #{conv_layer_forward.1} parent=11 // pred_check
        %p118 = pneg %p56
      $region14: #{conv_layer_forward.1} parent=11 // pred_check_branch
        %120 = sbr.rel (%p118) target = $region16
      $region15: #{conv_layer_forward.1} parent=11 // pred_region
        _
      $region16: #{conv_layer_forward.1} parent=11 // pred_fallthru
        _
      // Predicated region
      $region17: #{conv_layer_forward.1} parent=11 // pred_check
        %p121 = pneg %p77
      $region18: #{conv_layer_forward.1} parent=11 // pred_check_branch
        %123 = sbr.rel (%p121) target = $region20
      $region19: #{conv_layer_forward.1} parent=11 // pred_region
        _
      $region20: #{conv_layer_forward.1} parent=11 // pred_fallthru
        _
    $region12: #{conv_layer_forward.1} parent=5 // pred_fallthru
      _
    %p124 = scmp.lt.s32.totalorder %s9, 2
    // Predicated region
    $region21: #{conv_layer_forward.1} parent=5 // pred_check
      %p125 = pneg %p124
    $region22: #{conv_layer_forward.1} parent=5 // pred_check_branch
      %127 = sbr.rel (%p125) target = $region24
    $region23: #{conv_layer_forward.1} parent=5 // pred_region
      // Predicated region
      $region25: #{conv_layer_forward.1} parent=23 // pred_check
        %p128 = pneg %p29
      $region26: #{conv_layer_forward.1} parent=23 // pred_check_branch
        %130 = sbr.rel (%p128) target = $region28
      $region27: #{conv_layer_forward.1} parent=23 // pred_region
        %p131 = scmp.lt.s32.totalorder %s9, 1
        %s132 = scalar_select %p131, %s9, 1
        %s133 = smul.addr %s132, 32
        %s134 = smul.addr %s133, 4
        %s135 = scalar_lea.vmem %s0, %s134
      $region28: #{conv_layer_forward.1} parent=23 // pred_fallthru
        _
    $region24: #{conv_layer_forward.1} parent=5 // pred_fallthru
      _
    %p136 = scmp.le.s32.totalorder 1, %s9
    %p137 = scmp.lt.s32.totalorder %s9, 3
    %p138 = pnand %p136, %p137
    %p139 = pneg %p138
    // Predicated region
    $region29: #{conv_layer_forward.1} parent=5 // pred_check
      _
    $region30: #{conv_layer_forward.1} parent=5 // pred_check_branch
      %141 = sbr.rel (%p138) target = $region32
    $region31: #{conv_layer_forward.1} parent=5 // pred_region
      %s142 = ssub.s32 %s9, 1
      %p143 = scmp.lt.s32.totalorder %s14, 1
      %s144 = scalar_select %p143, %s14, 1
      %s145 = smul.addr %s144, 32
      %s146 = smul.addr %s145, 4
      %s147 = scalar_lea.vmem %s0, %s146
      %p148 = pneg %p35
      %p149 = pneg %p32
      %p150 = pneg %p56
      %p151 = pneg %p53
      %p152 = pneg %p77
      %p153 = pneg %p74
      %p154 = pneg %p103
      %p155 = pneg %p100
      %p156 = scmp.lt.s32.totalorder %s14, 1
      %s157 = scalar_select %p156, %s14, 1
      %s158 = smul.addr %s157, 2
      %s159 = smul.addr %s158, 8
      %s160 = scalar_lea.vmem %s3, %s159
      %p161 = scmp.lt.s32.totalorder %s14, 1
      %s162 = scalar_select %p161, %s14, 1
      %s163 = smul.addr %s162, 32
      %s164 = smul.addr %s163, 4
      %s165 = scalar_lea.vmem %s0, %s164
      %p166 = scmp.lt.s32.totalorder %s14, 1
      %s167 = scalar_select %p166, %s14, 1
      %s168 = smul.addr %s167, 2
      %s169 = smul.addr %s168, 8
      %s170 = scalar_lea.vmem %s3, %s169
      %vm172 = vcmask 27648
      %173 = vst.msk [vmem:[#allocation2] sm:$0xf] %vm172, 0
      %174 = vst.msk [vmem:[#allocation2 + $0x4] sm:$0xf] %vm172, 0
      %vm175 = vcmask 24576
      %176 = vst.msk [vmem:[#allocation2 + $0x8] sm:$0x1] %vm175, 0
      %177 = vst.msk [vmem:[#allocation2 + $0xc] sm:$0xf] %vm172, 0
      %178 = vst.msk [vmem:[#allocation2 + $0x10] sm:$0xf] %vm172, 0
      %179 = vst.msk [vmem:[#allocation2 + $0x14] sm:$0x1] %vm175, 0
      %180 = vst.msk [vmem:[#allocation2 + $0x18] sm:$0xf] %vm172, 0
      %181 = vst.msk [vmem:[#allocation2 + $0x1c] sm:$0xf] %vm172, 0
      %182 = vst.msk [vmem:[#allocation2 + $0x20] sm:$0x1] %vm175, 0
      %183 = vst.msk [vmem:[#allocation2 + $0x24] sm:$0xf] %vm172, 0
      %184 = vst.msk [vmem:[#allocation2 + $0x28] sm:$0xf] %vm172, 0
      %185 = vst.msk [vmem:[#allocation2 + $0x2c] sm:$0x1] %vm175, 0
      %186 = vst.msk [vmem:[#allocation2 + $0x30] sm:$0xf] %vm172, 0
      %187 = vst.msk [vmem:[#allocation2 + $0x34] sm:$0xf] %vm172, 0
      %188 = vst.msk [vmem:[#allocation2 + $0x38] sm:$0x1] %vm175, 0
      %189 = vst.msk [vmem:[#allocation2 + $0x3c] sm:$0xf] %vm172, 0
      %190 = vst.msk [vmem:[#allocation2 + $0x40] sm:$0xf] %vm172, 0
      %191 = vst.msk [vmem:[#allocation2 + $0x44] sm:$0x1] %vm175, 0
      %192 = vst.msk [vmem:[#allocation2 + $0x48] sm:$0xf] %vm172, 0
      %193 = vst.msk [vmem:[#allocation2 + $0x4c] sm:$0xf] %vm172, 0
      %194 = vst.msk [vmem:[#allocation2 + $0x50] sm:$0x1] %vm175, 0
      %195 = vst.msk [vmem:[#allocation2 + $0x54] sm:$0xf] %vm172, 0
      %196 = vst.msk [vmem:[#allocation2 + $0x58] sm:$0xf] %vm172, 0
      %197 = vst.msk [vmem:[#allocation2 + $0x5c] sm:$0x1] %vm175, 0
      %198 = vst.msk [vmem:[#allocation2 + $0x60] sm:$0xf] %vm172, 0
      %199 = vst.msk [vmem:[#allocation2 + $0x64] sm:$0xf] %vm172, 0
      %200 = vst.msk [vmem:[#allocation2 + $0x68] sm:$0x1] %vm175, 0
      %201 = vst.msk [vmem:[#allocation2 + $0x6c] sm:$0xf] %vm172, 0
      %202 = vst.msk [vmem:[#allocation2 + $0x70] sm:$0xf] %vm172, 0
      %203 = vst.msk [vmem:[#allocation2 + $0x74] sm:$0x1] %vm175, 0
      %204 = vst.msk [vmem:[#allocation2 + $0x78] sm:$0xf] %vm172, 0
      %205 = vst.msk [vmem:[#allocation2 + $0x7c] sm:$0xf] %vm172, 0
      %206 = vst.msk [vmem:[#allocation2 + $0x80] sm:$0x1] %vm175, 0
      %207 = vst.msk [vmem:[#allocation2 + $0x84] sm:$0xf] %vm172, 0
      %208 = vst.msk [vmem:[#allocation2 + $0x88] sm:$0xf] %vm172, 0
      %209 = vst.msk [vmem:[#allocation2 + $0x8c] sm:$0x1] %vm175, 0
      %210 = vst.msk [vmem:[#allocation2 + $0x90] sm:$0xf] %vm172, 0
      %211 = vst.msk [vmem:[#allocation2 + $0x94] sm:$0xf] %vm172, 0
      %212 = vst.msk [vmem:[#allocation2 + $0x98] sm:$0x1] %vm175, 0
      %213 = vst.msk [vmem:[#allocation2 + $0x9c] sm:$0xf] %vm172, 0
      %214 = vst.msk [vmem:[#allocation2 + $0xa0] sm:$0xf] %vm172, 0
      %215 = vst.msk [vmem:[#allocation2 + $0xa4] sm:$0x1] %vm175, 0
      %216 = vst.msk [vmem:[#allocation2 + $0xa8] sm:$0xf] %vm172, 0
      %217 = vst.msk [vmem:[#allocation2 + $0xac] sm:$0xf] %vm172, 0
      %218 = vst.msk [vmem:[#allocation2 + $0xb0] sm:$0x1] %vm175, 0
      %219 = vst.msk [vmem:[#allocation2 + $0xb4] sm:$0xf] %vm172, 0
      %220 = vst.msk [vmem:[#allocation2 + $0xb8] sm:$0xf] %vm172, 0
      %221 = vst.msk [vmem:[#allocation2 + $0xbc] sm:$0x1] %vm175, 0
      %222 = vst.msk [vmem:[#allocation2 + $0xc0] sm:$0xf] %vm172, 0
      %223 = vst.msk [vmem:[#allocation2 + $0xc4] sm:$0xf] %vm172, 0
      %224 = vst.msk [vmem:[#allocation2 + $0xc8] sm:$0x1] %vm175, 0
      %225 = vst.msk [vmem:[#allocation2 + $0xcc] sm:$0xf] %vm172, 0
      %226 = vst.msk [vmem:[#allocation2 + $0xd0] sm:$0xf] %vm172, 0
      %227 = vst.msk [vmem:[#allocation2 + $0xd4] sm:$0x1] %vm175, 0
      %v228 = vld [vmem:[%s165] sm:$0xf]
      %v229 = vld [vmem:[%s165 + $0x4] sm:$0xf]
      %v230 = vld [vmem:[%s165 + $0x8] sm:$0xf]
      %v231 = vld [vmem:[%s165 + $0xc] sm:$0xf]
      %v232 = vld [vmem:[%s165 + $0x10] sm:$0xf]
      %v233 = vld [vmem:[%s165 + $0x14] sm:$0xf]
      %v234 = vld [vmem:[%s165 + $0x18] sm:$0xf]
      %v235 = vld [vmem:[%s165 + $0x1c] sm:$0xf]
      %v236 = vld [vmem:[%s165 + $0x20] sm:$0xf]
      %v237 = vld [vmem:[%s165 + $0x24] sm:$0xf]
      %v238 = vld [vmem:[%s165 + $0x28] sm:$0xf]
      %v239 = vld [vmem:[%s165 + $0x2c] sm:$0xf]
      %v240 = vld [vmem:[%s165 + $0x30] sm:$0xf]
      %v241 = vld [vmem:[%s165 + $0x34] sm:$0xf]
      %v242 = vld [vmem:[%s165 + $0x38] sm:$0xf]
      %v243 = vld [vmem:[%s165 + $0x3c] sm:$0xf]
      %v244 = vld [vmem:[%s165 + $0x40] sm:$0xf]
      %v245 = vld [vmem:[%s165 + $0x44] sm:$0xf]
      %v246 = vld [vmem:[%s165 + $0x48] sm:$0xf]
      %v247 = vld [vmem:[%s165 + $0x4c] sm:$0xf]
      %v248 = vld [vmem:[%s165 + $0x50] sm:$0xf]
      %v249 = vld [vmem:[%s165 + $0x54] sm:$0xf]
      %v250 = vld [vmem:[%s165 + $0x58] sm:$0xf]
      %v251 = vld [vmem:[%s165 + $0x5c] sm:$0xf]
      %v252 = vld [vmem:[%s165 + $0x60] sm:$0xf]
      %v253 = vld [vmem:[%s165 + $0x64] sm:$0xf]
      %v254 = vld [vmem:[%s165 + $0x68] sm:$0xf]
      %v255 = vld [vmem:[%s165 + $0x6c] sm:$0xf]
      %v256 = vld [vmem:[%s165 + $0x70] sm:$0xf]
      %v257 = vld [vmem:[%s165 + $0x74] sm:$0xf]
      %v258 = vld [vmem:[%s165 + $0x78] sm:$0xf]
      %v259 = vld [vmem:[%s165 + $0x7c] sm:$0xf]
      %vm260 = vsmask.f32 256
      %vm261 = vsmask.f32 4368
      %vm262 = vmor %vm260, %vm261
      %v264 = vshrl.u32 %v228, 16
      %v266 = vrot.slane %v264, 7
      %v267 = vshll.u32 %v228, 16
      %v269 = vor.u32 %v266, %v267
      %v270 = vrot.slane %v266, 4
      %v272 = vshrl.u32 %v229, 16
      %v274 = vrot.slane %v272, 7
      %v275 = vshll.u32 %v229, 16
      %v277 = vor.u32 %v274, %v275
      %v278 = vsel %vm262, %v270, %v277
      %v279 = vrot.slane %v274, 4
      %v281 = vshrl.u32 %v230, 16
      %v283 = vrot.slane %v281, 7
      %v284 = vshll.u32 %v230, 16
      %v286 = vor.u32 %v283, %v284
      %v287 = vrot.slane %v283, 4
      %v289 = vshrl.u32 %v231, 16
      %v291 = vrot.slane %v289, 7
      %v292 = vshll.u32 %v231, 16
      %v294 = vor.u32 %v291, %v292
      %v295 = vsel %vm262, %v287, %v294
      %v296 = vrot.slane %v291, 4
      %v298 = vshrl.u32 %v232, 16
      %v300 = vrot.slane %v298, 7
      %v301 = vshll.u32 %v232, 16
      %v303 = vor.u32 %v300, %v301
      %v304 = vrot.slane %v300, 4
      %v306 = vshrl.u32 %v233, 16
      %v308 = vrot.slane %v306, 7
      %v309 = vshll.u32 %v233, 16
      %v311 = vor.u32 %v308, %v309
      %v312 = vsel %vm262, %v304, %v311
      %v313 = vrot.slane %v308, 4
      %v315 = vshrl.u32 %v234, 16
      %v317 = vrot.slane %v315, 7
      %v318 = vshll.u32 %v234, 16
      %v320 = vor.u32 %v317, %v318
      %v321 = vrot.slane %v317, 4
      %v323 = vshrl.u32 %v235, 16
      %v325 = vrot.slane %v323, 7
      %v326 = vshll.u32 %v235, 16
      %v328 = vor.u32 %v325, %v326
      %v329 = vsel %vm262, %v321, %v328
      %v330 = vrot.slane %v325, 4
      %v332 = vshrl.u32 %v236, 16
      %v334 = vrot.slane %v332, 7
      %v335 = vshll.u32 %v236, 16
      %v337 = vor.u32 %v334, %v335
      %v338 = vrot.slane %v334, 4
      %v340 = vshrl.u32 %v237, 16
      %v342 = vrot.slane %v340, 7
      %v343 = vshll.u32 %v237, 16
      %v345 = vor.u32 %v342, %v343
      %v346 = vsel %vm262, %v338, %v345
      %v347 = vrot.slane %v342, 4
      %v349 = vshrl.u32 %v238, 16
      %v351 = vrot.slane %v349, 7
      %v352 = vshll.u32 %v238, 16
      %v354 = vor.u32 %v351, %v352
      %v355 = vrot.slane %v351, 4
      %v357 = vshrl.u32 %v239, 16
      %v359 = vrot.slane %v357, 7
      %v360 = vshll.u32 %v239, 16
      %v362 = vor.u32 %v359, %v360
      %v363 = vsel %vm262, %v355, %v362
      %v364 = vrot.slane %v359, 4
      %v366 = vshrl.u32 %v240, 16
      %v368 = vrot.slane %v366, 7
      %v369 = vshll.u32 %v240, 16
      %v371 = vor.u32 %v368, %v369
      %v372 = vrot.slane %v368, 4
      %v374 = vshrl.u32 %v241, 16
      %v376 = vrot.slane %v374, 7
      %v377 = vshll.u32 %v241, 16
      %v379 = vor.u32 %v376, %v377
      %v380 = vsel %vm262, %v372, %v379
      %v381 = vrot.slane %v376, 4
      %v383 = vshrl.u32 %v242, 16
      %v385 = vrot.slane %v383, 7
      %v386 = vshll.u32 %v242, 16
      %v388 = vor.u32 %v385, %v386
      %v389 = vrot.slane %v385, 4
      %v391 = vshrl.u32 %v243, 16
      %v393 = vrot.slane %v391, 7
      %v394 = vshll.u32 %v243, 16
      %v396 = vor.u32 %v393, %v394
      %v397 = vsel %vm262, %v389, %v396
      %v398 = vrot.slane %v393, 4
      %v400 = vshrl.u32 %v244, 16
      %v402 = vrot.slane %v400, 7
      %v403 = vshll.u32 %v244, 16
      %v405 = vor.u32 %v402, %v403
      %v406 = vrot.slane %v402, 4
      %v408 = vshrl.u32 %v245, 16
      %v410 = vrot.slane %v408, 7
      %v411 = vshll.u32 %v245, 16
      %v413 = vor.u32 %v410, %v411
      %v414 = vsel %vm262, %v406, %v413
      %v415 = vrot.slane %v410, 4
      %v417 = vshrl.u32 %v246, 16
      %v419 = vrot.slane %v417, 7
      %v420 = vshll.u32 %v246, 16
      %v422 = vor.u32 %v419, %v420
      %v423 = vrot.slane %v419, 4
      %v425 = vshrl.u32 %v247, 16
      %v427 = vrot.slane %v425, 7
      %v428 = vshll.u32 %v247, 16
      %v430 = vor.u32 %v427, %v428
      %v431 = vsel %vm262, %v423, %v430
      %v432 = vrot.slane %v427, 4
      %v434 = vshrl.u32 %v248, 16
      %v436 = vrot.slane %v434, 7
      %v437 = vshll.u32 %v248, 16
      %v439 = vor.u32 %v436, %v437
      %v440 = vrot.slane %v436, 4
      %v442 = vshrl.u32 %v249, 16
      %v444 = vrot.slane %v442, 7
      %v445 = vshll.u32 %v249, 16
      %v447 = vor.u32 %v444, %v445
      %v448 = vsel %vm262, %v440, %v447
      %v449 = vrot.slane %v444, 4
      %v451 = vshrl.u32 %v250, 16
      %v453 = vrot.slane %v451, 7
      %v454 = vshll.u32 %v250, 16
      %v456 = vor.u32 %v453, %v454
      %v457 = vrot.slane %v453, 4
      %v459 = vshrl.u32 %v251, 16
      %v461 = vrot.slane %v459, 7
      %v462 = vshll.u32 %v251, 16
      %v464 = vor.u32 %v461, %v462
      %v465 = vsel %vm262, %v457, %v464
      %v466 = vrot.slane %v461, 4
      %v468 = vshrl.u32 %v252, 16
      %v470 = vrot.slane %v468, 7
      %v471 = vshll.u32 %v252, 16
      %v473 = vor.u32 %v470, %v471
      %v474 = vrot.slane %v470, 4
      %v476 = vshrl.u32 %v253, 16
      %v478 = vrot.slane %v476, 7
      %v479 = vshll.u32 %v253, 16
      %v481 = vor.u32 %v478, %v479
      %v482 = vsel %vm262, %v474, %v481
      %v483 = vrot.slane %v478, 4
      %v485 = vshrl.u32 %v254, 16
      %v487 = vrot.slane %v485, 7
      %v488 = vshll.u32 %v254, 16
      %v490 = vor.u32 %v487, %v488
      %v491 = vrot.slane %v487, 4
      %v493 = vshrl.u32 %v255, 16
      %v495 = vrot.slane %v493, 7
      %v496 = vshll.u32 %v255, 16
      %v498 = vor.u32 %v495, %v496
      %v499 = vsel %vm262, %v491, %v498
      %v500 = vrot.slane %v495, 4
      %v502 = vshrl.u32 %v256, 16
      %v504 = vrot.slane %v502, 7
      %v505 = vshll.u32 %v256, 16
      %v507 = vor.u32 %v504, %v505
      %v508 = vrot.slane %v504, 4
      %v510 = vshrl.u32 %v257, 16
      %v512 = vrot.slane %v510, 7
      %v513 = vshll.u32 %v257, 16
      %v515 = vor.u32 %v512, %v513
      %v516 = vsel %vm262, %v508, %v515
      %v517 = vrot.slane %v512, 4
      %v519 = vshrl.u32 %v258, 16
      %v521 = vrot.slane %v519, 7
      %v522 = vshll.u32 %v258, 16
      %v524 = vor.u32 %v521, %v522
      %v525 = vrot.slane %v521, 4
      %v527 = vshrl.u32 %v259, 16
      %v529 = vrot.slane %v527, 7
      %v530 = vshll.u32 %v259, 16
      %v532 = vor.u32 %v529, %v530
      %v533 = vsel %vm262, %v525, %v532
      %v534 = vrot.slane %v529, 4
      %s583 = scalar_lea.vmem [#allocation2], 12
      %vm584 = vcmask 27648
      %vm585 = vsmask.f32 7938
      %vm586 = vmand %vm584, %vm585
      %v587 = vld [vmem:[%s583] sm:$0xf]
      %v588 = vsel %vm586, %v269, %v587
      %589 = vst [vmem:[%s583] sm:$0xf] %v588
      %590 = vst.msk [vmem:[%s583 + $0x4] sm:$0xf] %vm172, %v278
      %vm591 = vcmask 24576
      %vm592 = vmand %vm591, %vm260
      %v593 = vld [vmem:[%s583 + $0x8] sm:$0x1]
      %v594 = vsel %vm592, %v279, %v593
      %595 = vst [vmem:[%s583 + $0x8] sm:$0x1] %v594
      %v596 = vld [vmem:[%s583 + $0xc] sm:$0xf]
      %v597 = vsel %vm586, %v286, %v596
      %598 = vst [vmem:[%s583 + $0xc] sm:$0xf] %v597
      %599 = vst.msk [vmem:[%s583 + $0x10] sm:$0xf] %vm172, %v295
      %v600 = vld [vmem:[%s583 + $0x14] sm:$0x1]
      %v601 = vsel %vm592, %v296, %v600
      %602 = vst [vmem:[%s583 + $0x14] sm:$0x1] %v601
      %v603 = vld [vmem:[%s583 + $0x18] sm:$0xf]
      %v604 = vsel %vm586, %v303, %v603
      %605 = vst [vmem:[%s583 + $0x18] sm:$0xf] %v604
      %606 = vst.msk [vmem:[%s583 + $0x1c] sm:$0xf] %vm172, %v312
      %v607 = vld [vmem:[%s583 + $0x20] sm:$0x1]
      %v608 = vsel %vm592, %v313, %v607
      %609 = vst [vmem:[%s583 + $0x20] sm:$0x1] %v608
      %v610 = vld [vmem:[%s583 + $0x24] sm:$0xf]
      %v611 = vsel %vm586, %v320, %v610
      %612 = vst [vmem:[%s583 + $0x24] sm:$0xf] %v611
      %613 = vst.msk [vmem:[%s583 + $0x28] sm:$0xf] %vm172, %v329
      %v614 = vld [vmem:[%s583 + $0x2c] sm:$0x1]
      %v615 = vsel %vm592, %v330, %v614
      %616 = vst [vmem:[%s583 + $0x2c] sm:$0x1] %v615
      %v617 = vld [vmem:[%s583 + $0x30] sm:$0xf]
      %v618 = vsel %vm586, %v337, %v617
      %619 = vst [vmem:[%s583 + $0x30] sm:$0xf] %v618
      %620 = vst.msk [vmem:[%s583 + $0x34] sm:$0xf] %vm172, %v346
      %v621 = vld [vmem:[%s583 + $0x38] sm:$0x1]
      %v622 = vsel %vm592, %v347, %v621
      %623 = vst [vmem:[%s583 + $0x38] sm:$0x1] %v622
      %v624 = vld [vmem:[%s583 + $0x3c] sm:$0xf]
      %v625 = vsel %vm586, %v354, %v624
      %626 = vst [vmem:[%s583 + $0x3c] sm:$0xf] %v625
      %627 = vst.msk [vmem:[%s583 + $0x40] sm:$0xf] %vm172, %v363
      %v628 = vld [vmem:[%s583 + $0x44] sm:$0x1]
      %v629 = vsel %vm592, %v364, %v628
      %630 = vst [vmem:[%s583 + $0x44] sm:$0x1] %v629
      %v631 = vld [vmem:[%s583 + $0x48] sm:$0xf]
      %v632 = vsel %vm586, %v371, %v631
      %633 = vst [vmem:[%s583 + $0x48] sm:$0xf] %v632
      %634 = vst.msk [vmem:[%s583 + $0x4c] sm:$0xf] %vm172, %v380
      %v635 = vld [vmem:[%s583 + $0x50] sm:$0x1]
      %v636 = vsel %vm592, %v381, %v635
      %637 = vst [vmem:[%s583 + $0x50] sm:$0x1] %v636
      %v638 = vld [vmem:[%s583 + $0x54] sm:$0xf]
      %v639 = vsel %vm586, %v388, %v638
      %640 = vst [vmem:[%s583 + $0x54] sm:$0xf] %v639
      %641 = vst.msk [vmem:[%s583 + $0x58] sm:$0xf] %vm172, %v397
      %v642 = vld [vmem:[%s583 + $0x5c] sm:$0x1]
      %v643 = vsel %vm592, %v398, %v642
      %644 = vst [vmem:[%s583 + $0x5c] sm:$0x1] %v643
      %v645 = vld [vmem:[%s583 + $0x60] sm:$0xf]
      %v646 = vsel %vm586, %v405, %v645
      %647 = vst [vmem:[%s583 + $0x60] sm:$0xf] %v646
      %648 = vst.msk [vmem:[%s583 + $0x64] sm:$0xf] %vm172, %v414
      %v649 = vld [vmem:[%s583 + $0x68] sm:$0x1]
      %v650 = vsel %vm592, %v415, %v649
      %651 = vst [vmem:[%s583 + $0x68] sm:$0x1] %v650
      %v652 = vld [vmem:[%s583 + $0x6c] sm:$0xf]
      %v653 = vsel %vm586, %v422, %v652
      %654 = vst [vmem:[%s583 + $0x6c] sm:$0xf] %v653
      %655 = vst.msk [vmem:[%s583 + $0x70] sm:$0xf] %vm172, %v431
      %v656 = vld [vmem:[%s583 + $0x74] sm:$0x1]
      %v657 = vsel %vm592, %v432, %v656
      %658 = vst [vmem:[%s583 + $0x74] sm:$0x1] %v657
      %v659 = vld [vmem:[%s583 + $0x78] sm:$0xf]
      %v660 = vsel %vm586, %v439, %v659
      %661 = vst [vmem:[%s583 + $0x78] sm:$0xf] %v660
      %662 = vst.msk [vmem:[%s583 + $0x7c] sm:$0xf] %vm172, %v448
      %v663 = vld [vmem:[%s583 + $0x80] sm:$0x1]
      %v664 = vsel %vm592, %v449, %v663
      %665 = vst [vmem:[%s583 + $0x80] sm:$0x1] %v664
      %v666 = vld [vmem:[%s583 + $0x84] sm:$0xf]
      %v667 = vsel %vm586, %v456, %v666
      %668 = vst [vmem:[%s583 + $0x84] sm:$0xf] %v667
      %669 = vst.msk [vmem:[%s583 + $0x88] sm:$0xf] %vm172, %v465
      %v670 = vld [vmem:[%s583 + $0x8c] sm:$0x1]
      %v671 = vsel %vm592, %v466, %v670
      %672 = vst [vmem:[%s583 + $0x8c] sm:$0x1] %v671
      %v673 = vld [vmem:[%s583 + $0x90] sm:$0xf]
      %v674 = vsel %vm586, %v473, %v673
      %675 = vst [vmem:[%s583 + $0x90] sm:$0xf] %v674
      %676 = vst.msk [vmem:[%s583 + $0x94] sm:$0xf] %vm172, %v482
      %v677 = vld [vmem:[%s583 + $0x98] sm:$0x1]
      %v678 = vsel %vm592, %v483, %v677
      %679 = vst [vmem:[%s583 + $0x98] sm:$0x1] %v678
      %v680 = vld [vmem:[%s583 + $0x9c] sm:$0xf]
      %v681 = vsel %vm586, %v490, %v680
      %682 = vst [vmem:[%s583 + $0x9c] sm:$0xf] %v681
      %683 = vst.msk [vmem:[%s583 + $0xa0] sm:$0xf] %vm172, %v499
      %v684 = vld [vmem:[%s583 + $0xa4] sm:$0x1]
      %v685 = vsel %vm592, %v500, %v684
      %686 = vst [vmem:[%s583 + $0xa4] sm:$0x1] %v685
      %v687 = vld [vmem:[%s583 + $0xa8] sm:$0xf]
      %v688 = vsel %vm586, %v507, %v687
      %689 = vst [vmem:[%s583 + $0xa8] sm:$0xf] %v688
      %690 = vst.msk [vmem:[%s583 + $0xac] sm:$0xf] %vm172, %v516
      %v691 = vld [vmem:[%s583 + $0xb0] sm:$0x1]
      %v692 = vsel %vm592, %v517, %v691
      %693 = vst [vmem:[%s583 + $0xb0] sm:$0x1] %v692
      %v694 = vld [vmem:[%s583 + $0xb4] sm:$0xf]
      %v695 = vsel %vm586, %v524, %v694
      %696 = vst [vmem:[%s583 + $0xb4] sm:$0xf] %v695
      %697 = vst.msk [vmem:[%s583 + $0xb8] sm:$0xf] %vm172, %v533
      %v698 = vld [vmem:[%s583 + $0xbc] sm:$0x1]
      %v699 = vsel %vm592, %v534, %v698
      %700 = vst [vmem:[%s583 + $0xbc] sm:$0x1] %v699
      %v701 = vld [vmem:[#allocation2] sm:$0xf]
      %v702 = vld [vmem:[#allocation2 + $0x4] sm:$0xf]
      %v703 = vld [vmem:[#allocation2 + $0xc] sm:$0xf]
      %v704 = vld [vmem:[#allocation2 + $0x10] sm:$0xf]
      %v705 = vld [vmem:[#allocation2 + $0x18] sm:$0xf]
      %v706 = vld [vmem:[#allocation2 + $0x1c] sm:$0xf]
      %v707 = vld [vmem:[#allocation2 + $0x24] sm:$0xf]
      %v708 = vld [vmem:[#allocation2 + $0x28] sm:$0xf]
      %v709 = vld [vmem:[#allocation2 + $0x30] sm:$0xf]
      %v710 = vld [vmem:[#allocation2 + $0x34] sm:$0xf]
      %v711 = vld [vmem:[#allocation2 + $0x3c] sm:$0xf]
      %v712 = vld [vmem:[#allocation2 + $0x40] sm:$0xf]
      %v713 = vld [vmem:[#allocation2 + $0x48] sm:$0xf]
      %v714 = vld [vmem:[#allocation2 + $0x4c] sm:$0xf]
      %v715 = vld [vmem:[#allocation2 + $0x54] sm:$0xf]
      %v716 = vld [vmem:[#allocation2 + $0x58] sm:$0xf]
      %v717 = vld [vmem:[#allocation2 + $0x60] sm:$0xf]
      %v718 = vld [vmem:[#allocation2 + $0x64] sm:$0xf]
      %v719 = vld [vmem:[#allocation2 + $0x6c] sm:$0xf]
      %v720 = vld [vmem:[#allocation2 + $0x70] sm:$0xf]
      %v721 = vld [vmem:[#allocation2 + $0x78] sm:$0xf]
      %v722 = vld [vmem:[#allocation2 + $0x7c] sm:$0xf]
      %v723 = vld [vmem:[#allocation2 + $0x84] sm:$0xf]
      %v724 = vld [vmem:[#allocation2 + $0x88] sm:$0xf]
      %v725 = vld [vmem:[#allocation2 + $0x90] sm:$0xf]
      %v726 = vld [vmem:[#allocation2 + $0x94] sm:$0xf]
      %v727 = vld [vmem:[#allocation2 + $0x9c] sm:$0xf]
      %v728 = vld [vmem:[#allocation2 + $0xa0] sm:$0xf]
      %v729 = vld [vmem:[#allocation2 + $0xa8] sm:$0xf]
      %v730 = vld [vmem:[#allocation2 + $0xac] sm:$0xf]
      %v731 = vld [vmem:[#allocation2 + $0xb4] sm:$0xf]
      %v732 = vld [vmem:[#allocation2 + $0xb8] sm:$0xf]
      %v765 = vunpack.c.l.b16 %v701
      %v766 = vunpack.c.l.b16 %v702
      %v767 = vunpack.c.l.b16 %v703
      %v768 = vunpack.c.l.b16 %v704
      %v769 = vunpack.c.l.b16 %v705
      %v770 = vunpack.c.l.b16 %v706
      %v771 = vunpack.c.l.b16 %v707
      %v772 = vunpack.c.l.b16 %v708
      %v773 = vunpack.c.l.b16 %v709
      %v774 = vunpack.c.l.b16 %v710
      %v775 = vunpack.c.l.b16 %v711
      %v776 = vunpack.c.l.b16 %v712
      %v777 = vunpack.c.l.b16 %v713
      %v778 = vunpack.c.l.b16 %v714
      %v779 = vunpack.c.l.b16 %v715
      %v780 = vunpack.c.l.b16 %v716
      %v781 = vunpack.c.l.b16 %v717
      %v782 = vunpack.c.l.b16 %v718
      %v783 = vunpack.c.l.b16 %v719
      %v784 = vunpack.c.l.b16 %v720
      %v785 = vunpack.c.l.b16 %v721
      %v786 = vunpack.c.l.b16 %v722
      %v787 = vunpack.c.l.b16 %v723
      %v788 = vunpack.c.l.b16 %v724
      %v789 = vunpack.c.l.b16 %v725
      %v790 = vunpack.c.l.b16 %v726
      %v791 = vunpack.c.l.b16 %v727
      %v792 = vunpack.c.l.b16 %v728
      %v793 = vunpack.c.l.b16 %v729
      %v794 = vunpack.c.l.b16 %v730
      %v795 = vunpack.c.l.b16 %v731
      %v796 = vunpack.c.l.b16 %v732
      %v797 = vpack.c.b16 %v766, %v765
      %v798 = vpack.c.b16 %v768, %v767
      %v799 = vpack.c.b16 %v770, %v769
      %v800 = vpack.c.b16 %v772, %v771
      %v801 = vpack.c.b16 %v774, %v773
      %v802 = vpack.c.b16 %v776, %v775
      %v803 = vpack.c.b16 %v778, %v777
      %v804 = vpack.c.b16 %v780, %v779
      %v805 = vpack.c.b16 %v782, %v781
      %v806 = vpack.c.b16 %v784, %v783
      %v807 = vpack.c.b16 %v786, %v785
      %v808 = vpack.c.b16 %v788, %v787
      %v809 = vpack.c.b16 %v790, %v789
      %v810 = vpack.c.b16 %v792, %v791
      %v811 = vpack.c.b16 %v794, %v793
      %v812 = vpack.c.b16 %v796, %v795
      %vm829 = vcmask 31744
      %830 = vst.msk [vmem:[#allocation3] sm:$0xff] %vm829, %v797
      %831 = vst.msk [vmem:[#allocation3 + $0x8] sm:$0xff] %vm829, %v798
      %832 = vst.msk [vmem:[#allocation3 + $0x10] sm:$0xff] %vm829, %v799
      %833 = vst.msk [vmem:[#allocation3 + $0x18] sm:$0xff] %vm829, %v800
      %834 = vst.msk [vmem:[#allocation3 + $0x20] sm:$0xff] %vm829, %v801
      %835 = vst.msk [vmem:[#allocation3 + $0x28] sm:$0xff] %vm829, %v802
      %836 = vst.msk [vmem:[#allocation3 + $0x30] sm:$0xff] %vm829, %v803
      %837 = vst.msk [vmem:[#allocation3 + $0x38] sm:$0xff] %vm829, %v804
      %838 = vst.msk [vmem:[#allocation3 + $0x40] sm:$0xff] %vm829, %v805
      %839 = vst.msk [vmem:[#allocation3 + $0x48] sm:$0xff] %vm829, %v806
      %840 = vst.msk [vmem:[#allocation3 + $0x50] sm:$0xff] %vm829, %v807
      %841 = vst.msk [vmem:[#allocation3 + $0x58] sm:$0xff] %vm829, %v808
      %842 = vst.msk [vmem:[#allocation3 + $0x60] sm:$0xff] %vm829, %v809
      %843 = vst.msk [vmem:[#allocation3 + $0x68] sm:$0xff] %vm829, %v810
      %844 = vst.msk [vmem:[#allocation3 + $0x70] sm:$0xff] %vm829, %v811
      %845 = vst.msk [vmem:[#allocation3 + $0x78] sm:$0xff] %vm829, %v812
      %v846 = vld [vmem:[#allocation2] sm:$0xf]
      %v847 = vld [vmem:[#allocation2 + $0x4] sm:$0xf]
      %v848 = vld [vmem:[#allocation2 + $0x8] sm:$0x1]
      %v849 = vld [vmem:[#allocation2 + $0xc] sm:$0xf]
      %v850 = vld [vmem:[#allocation2 + $0x10] sm:$0xf]
      %v851 = vld [vmem:[#allocation2 + $0x14] sm:$0x1]
      %v852 = vld [vmem:[#allocation2 + $0x18] sm:$0xf]
      %v853 = vld [vmem:[#allocation2 + $0x1c] sm:$0xf]
      %v854 = vld [vmem:[#allocation2 + $0x20] sm:$0x1]
      %v855 = vld [vmem:[#allocation2 + $0x24] sm:$0xf]
      %v856 = vld [vmem:[#allocation2 + $0x28] sm:$0xf]
      %v857 = vld [vmem:[#allocation2 + $0x2c] sm:$0x1]
      %v858 = vld [vmem:[#allocation2 + $0x30] sm:$0xf]
      %v859 = vld [vmem:[#allocation2 + $0x34] sm:$0xf]
      %v860 = vld [vmem:[#allocation2 + $0x38] sm:$0x1]
      %v861 = vld [vmem:[#allocation2 + $0x3c] sm:$0xf]
      %v862 = vld [vmem:[#allocation2 + $0x40] sm:$0xf]
      %v863 = vld [vmem:[#allocation2 + $0x44] sm:$0x1]
      %v864 = vld [vmem:[#allocation2 + $0x48] sm:$0xf]
      %v865 = vld [vmem:[#allocation2 + $0x4c] sm:$0xf]
      %v866 = vld [vmem:[#allocation2 + $0x50] sm:$0x1]
      %v867 = vld [vmem:[#allocation2 + $0x54] sm:$0xf]
      %v868 = vld [vmem:[#allocation2 + $0x58] sm:$0xf]
      %v869 = vld [vmem:[#allocation2 + $0x5c] sm:$0x1]
      %v870 = vld [vmem:[#allocation2 + $0x60] sm:$0xf]
      %v871 = vld [vmem:[#allocation2 + $0x64] sm:$0xf]
      %v872 = vld [vmem:[#allocation2 + $0x68] sm:$0x1]
      %v873 = vld [vmem:[#allocation2 + $0x6c] sm:$0xf]
      %v874 = vld [vmem:[#allocation2 + $0x70] sm:$0xf]
      %v875 = vld [vmem:[#allocation2 + $0x74] sm:$0x1]
      %v876 = vld [vmem:[#allocation2 + $0x78] sm:$0xf]
      %v877 = vld [vmem:[#allocation2 + $0x7c] sm:$0xf]
      %v878 = vld [vmem:[#allocation2 + $0x80] sm:$0x1]
      %v879 = vld [vmem:[#allocation2 + $0x84] sm:$0xf]
      %v880 = vld [vmem:[#allocation2 + $0x88] sm:$0xf]
      %v881 = vld [vmem:[#allocation2 + $0x8c] sm:$0x1]
      %v882 = vld [vmem:[#allocation2 + $0x90] sm:$0xf]
      %v883 = vld [vmem:[#allocation2 + $0x94] sm:$0xf]
      %v884 = vld [vmem:[#allocation2 + $0x98] sm:$0x1]
      %v885 = vld [vmem:[#allocation2 + $0x9c] sm:$0xf]
      %v886 = vld [vmem:[#allocation2 + $0xa0] sm:$0xf]
      %v887 = vld [vmem:[#allocation2 + $0xa4] sm:$0x1]
      %v888 = vld [vmem:[#allocation2 + $0xa8] sm:$0xf]
      %v889 = vld [vmem:[#allocation2 + $0xac] sm:$0xf]
      %v890 = vld [vmem:[#allocation2 + $0xb0] sm:$0x1]
      %v891 = vld [vmem:[#allocation2 + $0xb4] sm:$0xf]
      %v892 = vld [vmem:[#allocation2 + $0xb8] sm:$0xf]
      %v893 = vld [vmem:[#allocation2 + $0xbc] sm:$0x1]
      %v942 = vunpack.c.l.b16 %v846
      %v943 = vunpack.c.l.b16 %v847
      %v944 = vunpack.c.l.b16 %v848
      %v945 = vunpack.c.l.b16 %v849
      %v946 = vunpack.c.l.b16 %v850
      %v947 = vunpack.c.l.b16 %v851
      %v948 = vunpack.c.l.b16 %v852
      %v949 = vunpack.c.l.b16 %v853
      %v950 = vunpack.c.l.b16 %v854
      %v951 = vunpack.c.l.b16 %v855
      %v952 = vunpack.c.l.b16 %v856
      %v953 = vunpack.c.l.b16 %v857
      %v954 = vunpack.c.l.b16 %v858
      %v955 = vunpack.c.l.b16 %v859
      %v956 = vunpack.c.l.b16 %v860
      %v957 = vunpack.c.l.b16 %v861
      %v958 = vunpack.c.l.b16 %v862
      %v959 = vunpack.c.l.b16 %v863
      %v960 = vunpack.c.l.b16 %v864
      %v961 = vunpack.c.l.b16 %v865
      %v962 = vunpack.c.l.b16 %v866
      %v963 = vunpack.c.l.b16 %v867
      %v964 = vunpack.c.l.b16 %v868
      %v965 = vunpack.c.l.b16 %v869
      %v966 = vunpack.c.l.b16 %v870
      %v967 = vunpack.c.l.b16 %v871
      %v968 = vunpack.c.l.b16 %v872
      %v969 = vunpack.c.l.b16 %v873
      %v970 = vunpack.c.l.b16 %v874
      %v971 = vunpack.c.l.b16 %v875
      %v972 = vunpack.c.l.b16 %v876
      %v973 = vunpack.c.l.b16 %v877
      %v974 = vunpack.c.l.b16 %v878
      %v975 = vunpack.c.l.b16 %v879
      %v976 = vunpack.c.l.b16 %v880
      %v977 = vunpack.c.l.b16 %v881
      %v978 = vunpack.c.l.b16 %v882
      %v979 = vunpack.c.l.b16 %v883
      %v980 = vunpack.c.l.b16 %v884
      %v981 = vunpack.c.l.b16 %v885
      %v982 = vunpack.c.l.b16 %v886
      %v983 = vunpack.c.l.b16 %v887
      %v984 = vunpack.c.l.b16 %v888
      %v985 = vunpack.c.l.b16 %v889
      %v986 = vunpack.c.l.b16 %v890
      %v987 = vunpack.c.l.b16 %v891
      %v988 = vunpack.c.l.b16 %v892
      %v989 = vunpack.c.l.b16 %v893
      %v990 = vpack.c.b16 %v943, %v942
      %v991 = vpack.c.b16 %v944, %v944
      %v992 = vpack.c.b16 %v946, %v945
      %v993 = vpack.c.b16 %v947, %v947
      %v994 = vpack.c.b16 %v949, %v948
      %v995 = vpack.c.b16 %v950, %v950
      %v996 = vpack.c.b16 %v952, %v951
      %v997 = vpack.c.b16 %v953, %v953
      %v998 = vpack.c.b16 %v955, %v954
      %v999 = vpack.c.b16 %v956, %v956
      %v1000 = vpack.c.b16 %v958, %v957
      %v1001 = vpack.c.b16 %v959, %v959
      %v1002 = vpack.c.b16 %v961, %v960
      %v1003 = vpack.c.b16 %v962, %v962
      %v1004 = vpack.c.b16 %v964, %v963
      %v1005 = vpack.c.b16 %v965, %v965
      %v1006 = vpack.c.b16 %v967, %v966
      %v1007 = vpack.c.b16 %v968, %v968
      %v1008 = vpack.c.b16 %v970, %v969
      %v1009 = vpack.c.b16 %v971, %v971
      %v1010 = vpack.c.b16 %v973, %v972
      %v1011 = vpack.c.b16 %v974, %v974
      %v1012 = vpack.c.b16 %v976, %v975
      %v1013 = vpack.c.b16 %v977, %v977
      %v1014 = vpack.c.b16 %v979, %v978
      %v1015 = vpack.c.b16 %v980, %v980
      %v1016 = vpack.c.b16 %v982, %v981
      %v1017 = vpack.c.b16 %v983, %v983
      %v1018 = vpack.c.b16 %v985, %v984
      %v1019 = vpack.c.b16 %v986, %v986
      %v1020 = vpack.c.b16 %v988, %v987
      %v1021 = vpack.c.b16 %v989, %v989
      %vm1022 = vsmask.f32 7424
      %v1024 = vshrl.u32 %v990, 16
      %v1026 = vshll.u32 %v990, 16
      %v1028 = vrot.slane %v1026, 1
      %v1029 = vor.u32 %v1024, %v1028
      %v1031 = vshll.u32 %v991, 16
      %v1033 = vrot.slane %v1031, 1
      %v1034 = vsel %vm1022, %v1029, %v1033
      %v1036 = vshrl.u32 %v992, 16
      %v1038 = vshll.u32 %v992, 16
      %v1040 = vrot.slane %v1038, 1
      %v1041 = vor.u32 %v1036, %v1040
      %v1043 = vshll.u32 %v993, 16
      %v1045 = vrot.slane %v1043, 1
      %v1046 = vsel %vm1022, %v1041, %v1045
      %v1048 = vshrl.u32 %v994, 16
      %v1050 = vshll.u32 %v994, 16
      %v1052 = vrot.slane %v1050, 1
      %v1053 = vor.u32 %v1048, %v1052
      %v1055 = vshll.u32 %v995, 16
      %v1057 = vrot.slane %v1055, 1
      %v1058 = vsel %vm1022, %v1053, %v1057
      %v1060 = vshrl.u32 %v996, 16
      %v1062 = vshll.u32 %v996, 16
      %v1064 = vrot.slane %v1062, 1
      %v1065 = vor.u32 %v1060, %v1064
      %v1067 = vshll.u32 %v997, 16
      %v1069 = vrot.slane %v1067, 1
      %v1070 = vsel %vm1022, %v1065, %v1069
      %v1072 = vshrl.u32 %v998, 16
      %v1074 = vshll.u32 %v998, 16
      %v1076 = vrot.slane %v1074, 1
      %v1077 = vor.u32 %v1072, %v1076
      %v1079 = vshll.u32 %v999, 16
      %v1081 = vrot.slane %v1079, 1
      %v1082 = vsel %vm1022, %v1077, %v1081
      %v1084 = vshrl.u32 %v1000, 16
      %v1086 = vshll.u32 %v1000, 16
      %v1088 = vrot.slane %v1086, 1
      %v1089 = vor.u32 %v1084, %v1088
      %v1091 = vshll.u32 %v1001, 16
      %v1093 = vrot.slane %v1091, 1
      %v1094 = vsel %vm1022, %v1089, %v1093
      %v1096 = vshrl.u32 %v1002, 16
      %v1098 = vshll.u32 %v1002, 16
      %v1100 = vrot.slane %v1098, 1
      %v1101 = vor.u32 %v1096, %v1100
      %v1103 = vshll.u32 %v1003, 16
      %v1105 = vrot.slane %v1103, 1
      %v1106 = vsel %vm1022, %v1101, %v1105
      %v1108 = vshrl.u32 %v1004, 16
      %v1110 = vshll.u32 %v1004, 16
      %v1112 = vrot.slane %v1110, 1
      %v1113 = vor.u32 %v1108, %v1112
      %v1115 = vshll.u32 %v1005, 16
      %v1117 = vrot.slane %v1115, 1
      %v1118 = vsel %vm1022, %v1113, %v1117
      %v1120 = vshrl.u32 %v1006, 16
      %v1122 = vshll.u32 %v1006, 16
      %v1124 = vrot.slane %v1122, 1
      %v1125 = vor.u32 %v1120, %v1124
      %v1127 = vshll.u32 %v1007, 16
      %v1129 = vrot.slane %v1127, 1
      %v1130 = vsel %vm1022, %v1125, %v1129
      %v1132 = vshrl.u32 %v1008, 16
      %v1134 = vshll.u32 %v1008, 16
      %v1136 = vrot.slane %v1134, 1
      %v1137 = vor.u32 %v1132, %v1136
      %v1139 = vshll.u32 %v1009, 16
      %v1141 = vrot.slane %v1139, 1
      %v1142 = vsel %vm1022, %v1137, %v1141
      %v1144 = vshrl.u32 %v1010, 16
      %v1146 = vshll.u32 %v1010, 16
      %v1148 = vrot.slane %v1146, 1
      %v1149 = vor.u32 %v1144, %v1148
      %v1151 = vshll.u32 %v1011, 16
      %v1153 = vrot.slane %v1151, 1
      %v1154 = vsel %vm1022, %v1149, %v1153
      %v1156 = vshrl.u32 %v1012, 16
      %v1158 = vshll.u32 %v1012, 16
      %v1160 = vrot.slane %v1158, 1
      %v1161 = vor.u32 %v1156, %v1160
      %v1163 = vshll.u32 %v1013, 16
      %v1165 = vrot.slane %v1163, 1
      %v1166 = vsel %vm1022, %v1161, %v1165
      %v1168 = vshrl.u32 %v1014, 16
      %v1170 = vshll.u32 %v1014, 16
      %v1172 = vrot.slane %v1170, 1
      %v1173 = vor.u32 %v1168, %v1172
      %v1175 = vshll.u32 %v1015, 16
      %v1177 = vrot.slane %v1175, 1
      %v1178 = vsel %vm1022, %v1173, %v1177
      %v1180 = vshrl.u32 %v1016, 16
      %v1182 = vshll.u32 %v1016, 16
      %v1184 = vrot.slane %v1182, 1
      %v1185 = vor.u32 %v1180, %v1184
      %v1187 = vshll.u32 %v1017, 16
      %v1189 = vrot.slane %v1187, 1
      %v1190 = vsel %vm1022, %v1185, %v1189
      %v1192 = vshrl.u32 %v1018, 16
      %v1194 = vshll.u32 %v1018, 16
      %v1196 = vrot.slane %v1194, 1
      %v1197 = vor.u32 %v1192, %v1196
      %v1199 = vshll.u32 %v1019, 16
      %v1201 = vrot.slane %v1199, 1
      %v1202 = vsel %vm1022, %v1197, %v1201
      %v1204 = vshrl.u32 %v1020, 16
      %v1206 = vshll.u32 %v1020, 16
      %v1208 = vrot.slane %v1206, 1
      %v1209 = vor.u32 %v1204, %v1208
      %v1211 = vshll.u32 %v1021, 16
      %v1213 = vrot.slane %v1211, 1
      %v1214 = vsel %vm1022, %v1209, %v1213
      %1215 = vrot.lane.b32.xlu0 %v1034, 4
      %v1216 = vpop.permute.xlu0 %1215
      %1217 = vrot.lane.b32.xlu0 %v1046, 4
      %v1218 = vpop.permute.xlu0 %1217
      %1219 = vrot.lane.b32.xlu0 %v1058, 4
      %v1220 = vpop.permute.xlu0 %1219
      %1221 = vrot.lane.b32.xlu0 %v1070, 4
      %v1222 = vpop.permute.xlu0 %1221
      %1223 = vrot.lane.b32.xlu0 %v1082, 4
      %v1224 = vpop.permute.xlu0 %1223
      %1225 = vrot.lane.b32.xlu0 %v1094, 4
      %v1226 = vpop.permute.xlu0 %1225
      %1227 = vrot.lane.b32.xlu0 %v1106, 4
      %v1228 = vpop.permute.xlu0 %1227
      %1229 = vrot.lane.b32.xlu0 %v1118, 4
      %v1230 = vpop.permute.xlu0 %1229
      %1231 = vrot.lane.b32.xlu0 %v1130, 4
      %v1232 = vpop.permute.xlu0 %1231
      %1233 = vrot.lane.b32.xlu0 %v1142, 4
      %v1234 = vpop.permute.xlu0 %1233
      %1235 = vrot.lane.b32.xlu0 %v1154, 4
      %v1236 = vpop.permute.xlu0 %1235
      %1237 = vrot.lane.b32.xlu0 %v1166, 4
      %v1238 = vpop.permute.xlu0 %1237
      %1239 = vrot.lane.b32.xlu0 %v1178, 4
      %v1240 = vpop.permute.xlu0 %1239
      %1241 = vrot.lane.b32.xlu0 %v1190, 4
      %v1242 = vpop.permute.xlu0 %1241
      %1243 = vrot.lane.b32.xlu0 %v1202, 4
      %v1244 = vpop.permute.xlu0 %1243
      %1245 = vrot.lane.b32.xlu0 %v1214, 4
      %v1246 = vpop.permute.xlu0 %1245
      %vm1263 = vcmask 64544
      %1264 = vst.msk [vmem:[#allocation3] sm:$0xff] %vm1263, %v1216
      %1265 = vst.msk [vmem:[#allocation3 + $0x8] sm:$0xff] %vm1263, %v1218
      %1266 = vst.msk [vmem:[#allocation3 + $0x10] sm:$0xff] %vm1263, %v1220
      %1267 = vst.msk [vmem:[#allocation3 + $0x18] sm:$0xff] %vm1263, %v1222
      %1268 = vst.msk [vmem:[#allocation3 + $0x20] sm:$0xff] %vm1263, %v1224
      %1269 = vst.msk [vmem:[#allocation3 + $0x28] sm:$0xff] %vm1263, %v1226
      %1270 = vst.msk [vmem:[#allocation3 + $0x30] sm:$0xff] %vm1263, %v1228
      %1271 = vst.msk [vmem:[#allocation3 + $0x38] sm:$0xff] %vm1263, %v1230
      %1272 = vst.msk [vmem:[#allocation3 + $0x40] sm:$0xff] %vm1263, %v1232
      %1273 = vst.msk [vmem:[#allocation3 + $0x48] sm:$0xff] %vm1263, %v1234
      %1274 = vst.msk [vmem:[#allocation3 + $0x50] sm:$0xff] %vm1263, %v1236
      %1275 = vst.msk [vmem:[#allocation3 + $0x58] sm:$0xff] %vm1263, %v1238
      %1276 = vst.msk [vmem:[#allocation3 + $0x60] sm:$0xff] %vm1263, %v1240
      %1277 = vst.msk [vmem:[#allocation3 + $0x68] sm:$0xff] %vm1263, %v1242
      %1278 = vst.msk [vmem:[#allocation3 + $0x70] sm:$0xff] %vm1263, %v1244
      %1279 = vst.msk [vmem:[#allocation3 + $0x78] sm:$0xff] %vm1263, %v1246
      %v1280 = vld [vmem:[#allocation2] sm:$0xe]
      %v1281 = vld [vmem:[#allocation2 + $0x4] sm:$0xf]
      %v1282 = vld [vmem:[#allocation2 + $0x8] sm:$0x1]
      %v1283 = vld [vmem:[#allocation2 + $0xc] sm:$0xe]
      %v1284 = vld [vmem:[#allocation2 + $0x10] sm:$0xf]
      %v1285 = vld [vmem:[#allocation2 + $0x14] sm:$0x1]
      %v1286 = vld [vmem:[#allocation2 + $0x18] sm:$0xe]
      %v1287 = vld [vmem:[#allocation2 + $0x1c] sm:$0xf]
      %v1288 = vld [vmem:[#allocation2 + $0x20] sm:$0x1]
      %v1289 = vld [vmem:[#allocation2 + $0x24] sm:$0xe]
      %v1290 = vld [vmem:[#allocation2 + $0x28] sm:$0xf]
      %v1291 = vld [vmem:[#allocation2 + $0x2c] sm:$0x1]
      %v1292 = vld [vmem:[#allocation2 + $0x30] sm:$0xe]
      %v1293 = vld [vmem:[#allocation2 + $0x34] sm:$0xf]
      %v1294 = vld [vmem:[#allocation2 + $0x38] sm:$0x1]
      %v1295 = vld [vmem:[#allocation2 + $0x3c] sm:$0xe]
      %v1296 = vld [vmem:[#allocation2 + $0x40] sm:$0xf]
      %v1297 = vld [vmem:[#allocation2 + $0x44] sm:$0x1]
      %v1298 = vld [vmem:[#allocation2 + $0x48] sm:$0xe]
      %v1299 = vld [vmem:[#allocation2 + $0x4c] sm:$0xf]
      %v1300 = vld [vmem:[#allocation2 + $0x50] sm:$0x1]
      %v1301 = vld [vmem:[#allocation2 + $0x54] sm:$0xe]
      %v1302 = vld [vmem:[#allocation2 + $0x58] sm:$0xf]
      %v1303 = vld [vmem:[#allocation2 + $0x5c] sm:$0x1]
      %v1304 = vld [vmem:[#allocation2 + $0x60] sm:$0xe]
      %v1305 = vld [vmem:[#allocation2 + $0x64] sm:$0xf]
      %v1306 = vld [vmem:[#allocation2 + $0x68] sm:$0x1]
      %v1307 = vld [vmem:[#allocation2 + $0x6c] sm:$0xe]
      %v1308 = vld [vmem:[#allocation2 + $0x70] sm:$0xf]
      %v1309 = vld [vmem:[#allocation2 + $0x74] sm:$0x1]
      %v1310 = vld [vmem:[#allocation2 + $0x78] sm:$0xe]
      %v1311 = vld [vmem:[#allocation2 + $0x7c] sm:$0xf]
      %v1312 = vld [vmem:[#allocation2 + $0x80] sm:$0x1]
      %v1313 = vld [vmem:[#allocation2 + $0x84] sm:$0xe]
      %v1314 = vld [vmem:[#allocation2 + $0x88] sm:$0xf]
      %v1315 = vld [vmem:[#allocation2 + $0x8c] sm:$0x1]
      %v1316 = vld [vmem:[#allocation2 + $0x90] sm:$0xe]
      %v1317 = vld [vmem:[#allocation2 + $0x94] sm:$0xf]
      %v1318 = vld [vmem:[#allocation2 + $0x98] sm:$0x1]
      %v1319 = vld [vmem:[#allocation2 + $0x9c] sm:$0xe]
      %v1320 = vld [vmem:[#allocation2 + $0xa0] sm:$0xf]
      %v1321 = vld [vmem:[#allocation2 + $0xa4] sm:$0x1]
      %v1322 = vld [vmem:[#allocation2 + $0xa8] sm:$0xe]
      %v1323 = vld [vmem:[#allocation2 + $0xac] sm:$0xf]
      %v1324 = vld [vmem:[#allocation2 + $0xb0] sm:$0x1]
      %v1325 = vld [vmem:[#allocation2 + $0xb4] sm:$0xe]
      %v1326 = vld [vmem:[#allocation2 + $0xb8] sm:$0xf]
      %v1327 = vld [vmem:[#allocation2 + $0xbc] sm:$0x1]
      %v1376 = vunpack.c.l.b16 %v1280
      %v1377 = vunpack.c.l.b16 %v1281
      %v1378 = vunpack.c.l.b16 %v1282
      %v1379 = vunpack.c.l.b16 %v1283
      %v1380 = vunpack.c.l.b16 %v1284
      %v1381 = vunpack.c.l.b16 %v1285
      %v1382 = vunpack.c.l.b16 %v1286
      %v1383 = vunpack.c.l.b16 %v1287
      %v1384 = vunpack.c.l.b16 %v1288
      %v1385 = vunpack.c.l.b16 %v1289
      %v1386 = vunpack.c.l.b16 %v1290
      %v1387 = vunpack.c.l.b16 %v1291
      %v1388 = vunpack.c.l.b16 %v1292
      %v1389 = vunpack.c.l.b16 %v1293
      %v1390 = vunpack.c.l.b16 %v1294
      %v1391 = vunpack.c.l.b16 %v1295
      %v1392 = vunpack.c.l.b16 %v1296
      %v1393 = vunpack.c.l.b16 %v1297
      %v1394 = vunpack.c.l.b16 %v1298
      %v1395 = vunpack.c.l.b16 %v1299
      %v1396 = vunpack.c.l.b16 %v1300
      %v1397 = vunpack.c.l.b16 %v1301
      %v1398 = vunpack.c.l.b16 %v1302
      %v1399 = vunpack.c.l.b16 %v1303
      %v1400 = vunpack.c.l.b16 %v1304
      %v1401 = vunpack.c.l.b16 %v1305
      %v1402 = vunpack.c.l.b16 %v1306
      %v1403 = vunpack.c.l.b16 %v1307
      %v1404 = vunpack.c.l.b16 %v1308
      %v1405 = vunpack.c.l.b16 %v1309
      %v1406 = vunpack.c.l.b16 %v1310
      %v1407 = vunpack.c.l.b16 %v1311
      %v1408 = vunpack.c.l.b16 %v1312
      %v1409 = vunpack.c.l.b16 %v1313
      %v1410 = vunpack.c.l.b16 %v1314
      %v1411 = vunpack.c.l.b16 %v1315
      %v1412 = vunpack.c.l.b16 %v1316
      %v1413 = vunpack.c.l.b16 %v1317
      %v1414 = vunpack.c.l.b16 %v1318
      %v1415 = vunpack.c.l.b16 %v1319
      %v1416 = vunpack.c.l.b16 %v1320
      %v1417 = vunpack.c.l.b16 %v1321
      %v1418 = vunpack.c.l.b16 %v1322
      %v1419 = vunpack.c.l.b16 %v1323
      %v1420 = vunpack.c.l.b16 %v1324
      %v1421 = vunpack.c.l.b16 %v1325
      %v1422 = vunpack.c.l.b16 %v1326
      %v1423 = vunpack.c.l.b16 %v1327
      %v1424 = vpack.c.b16 %v1377, %v1376
      %v1425 = vpack.c.b16 %v1378, %v1378
      %v1426 = vpack.c.b16 %v1380, %v1379
      %v1427 = vpack.c.b16 %v1381, %v1381
      %v1428 = vpack.c.b16 %v1383, %v1382
      %v1429 = vpack.c.b16 %v1384, %v1384
      %v1430 = vpack.c.b16 %v1386, %v1385
      %v1431 = vpack.c.b16 %v1387, %v1387
      %v1432 = vpack.c.b16 %v1389, %v1388
      %v1433 = vpack.c.b16 %v1390, %v1390
      %v1434 = vpack.c.b16 %v1392, %v1391
      %v1435 = vpack.c.b16 %v1393, %v1393
      %v1436 = vpack.c.b16 %v1395, %v1394
      %v1437 = vpack.c.b16 %v1396, %v1396
      %v1438 = vpack.c.b16 %v1398, %v1397
      %v1439 = vpack.c.b16 %v1399, %v1399
      %v1440 = vpack.c.b16 %v1401, %v1400
      %v1441 = vpack.c.b16 %v1402, %v1402
      %v1442 = vpack.c.b16 %v1404, %v1403
      %v1443 = vpack.c.b16 %v1405, %v1405
      %v1444 = vpack.c.b16 %v1407, %v1406
      %v1445 = vpack.c.b16 %v1408, %v1408
      %v1446 = vpack.c.b16 %v1410, %v1409
      %v1447 = vpack.c.b16 %v1411, %v1411
      %v1448 = vpack.c.b16 %v1413, %v1412
      %v1449 = vpack.c.b16 %v1414, %v1414
      %v1450 = vpack.c.b16 %v1416, %v1415
      %v1451 = vpack.c.b16 %v1417, %v1417
      %v1452 = vpack.c.b16 %v1419, %v1418
      %v1453 = vpack.c.b16 %v1420, %v1420
      %v1454 = vpack.c.b16 %v1422, %v1421
      %v1455 = vpack.c.b16 %v1423, %v1423
      %vm1456 = vcmask 1046528
      %v1457 = vrot.slane %v1424, 1
      %v1458 = vrot.slane %v1425, 1
      %v1459 = vsel %vm1456, %v1457, %v1458
      %v1460 = vrot.slane %v1426, 1
      %v1461 = vrot.slane %v1427, 1
      %v1462 = vsel %vm1456, %v1460, %v1461
      %v1463 = vrot.slane %v1428, 1
      %v1464 = vrot.slane %v1429, 1
      %v1465 = vsel %vm1456, %v1463, %v1464
      %v1466 = vrot.slane %v1430, 1
      %v1467 = vrot.slane %v1431, 1
      %v1468 = vsel %vm1456, %v1466, %v1467
      %v1469 = vrot.slane %v1432, 1
      %v1470 = vrot.slane %v1433, 1
      %v1471 = vsel %vm1456, %v1469, %v1470
      %v1472 = vrot.slane %v1434, 1
      %v1473 = vrot.slane %v1435, 1
      %v1474 = vsel %vm1456, %v1472, %v1473
      %v1475 = vrot.slane %v1436, 1
      %v1476 = vrot.slane %v1437, 1
      %v1477 = vsel %vm1456, %v1475, %v1476
      %v1478 = vrot.slane %v1438, 1
      %v1479 = vrot.slane %v1439, 1
      %v1480 = vsel %vm1456, %v1478, %v1479
      %v1481 = vrot.slane %v1440, 1
      %v1482 = vrot.slane %v1441, 1
      %v1483 = vsel %vm1456, %v1481, %v1482
      %v1484 = vrot.slane %v1442, 1
      %v1485 = vrot.slane %v1443, 1
      %v1486 = vsel %vm1456, %v1484, %v1485
      %v1487 = vrot.slane %v1444, 1
      %v1488 = vrot.slane %v1445, 1
      %v1489 = vsel %vm1456, %v1487, %v1488
      %v1490 = vrot.slane %v1446, 1
      %v1491 = vrot.slane %v1447, 1
      %v1492 = vsel %vm1456, %v1490, %v1491
      %v1493 = vrot.slane %v1448, 1
      %v1494 = vrot.slane %v1449, 1
      %v1495 = vsel %vm1456, %v1493, %v1494
      %v1496 = vrot.slane %v1450, 1
      %v1497 = vrot.slane %v1451, 1
      %v1498 = vsel %vm1456, %v1496, %v1497
      %v1499 = vrot.slane %v1452, 1
      %v1500 = vrot.slane %v1453, 1
      %v1501 = vsel %vm1456, %v1499, %v1500
      %v1502 = vrot.slane %v1454, 1
      %v1503 = vrot.slane %v1455, 1
      %v1504 = vsel %vm1456, %v1502, %v1503
      %1505 = vrot.lane.b32.xlu0 %v1459, 8
      %v1506 = vpop.permute.xlu0 %1505
      %1507 = vrot.lane.b32.xlu0 %v1462, 8
      %v1508 = vpop.permute.xlu0 %1507
      %1509 = vrot.lane.b32.xlu0 %v1465, 8
      %v1510 = vpop.permute.xlu0 %1509
      %1511 = vrot.lane.b32.xlu0 %v1468, 8
      %v1512 = vpop.permute.xlu0 %1511
      %1513 = vrot.lane.b32.xlu0 %v1471, 8
      %v1514 = vpop.permute.xlu0 %1513
      %1515 = vrot.lane.b32.xlu0 %v1474, 8
      %v1516 = vpop.permute.xlu0 %1515
      %1517 = vrot.lane.b32.xlu0 %v1477, 8
      %v1518 = vpop.permute.xlu0 %1517
      %1519 = vrot.lane.b32.xlu0 %v1480, 8
      %v1520 = vpop.permute.xlu0 %1519
      %1521 = vrot.lane.b32.xlu0 %v1483, 8
      %v1522 = vpop.permute.xlu0 %1521
      %1523 = vrot.lane.b32.xlu0 %v1486, 8
      %v1524 = vpop.permute.xlu0 %1523
      %1525 = vrot.lane.b32.xlu0 %v1489, 8
      %v1526 = vpop.permute.xlu0 %1525
      %1527 = vrot.lane.b32.xlu0 %v1492, 8
      %v1528 = vpop.permute.xlu0 %1527
      %1529 = vrot.lane.b32.xlu0 %v1495, 8
      %v1530 = vpop.permute.xlu0 %1529
      %1531 = vrot.lane.b32.xlu0 %v1498, 8
      %v1532 = vpop.permute.xlu0 %1531
      %1533 = vrot.lane.b32.xlu0 %v1501, 8
      %v1534 = vpop.permute.xlu0 %1533
      %1535 = vrot.lane.b32.xlu0 %v1504, 8
      %v1536 = vpop.permute.xlu0 %1535
      %vm1553 = vcmask 97344
      %1554 = vst.msk [vmem:[#allocation3] sm:$0xff] %vm1553, %v1506
      %1555 = vst.msk [vmem:[#allocation3 + $0x8] sm:$0xff] %vm1553, %v1508
      %1556 = vst.msk [vmem:[#allocation3 + $0x10] sm:$0xff] %vm1553, %v1510
      %1557 = vst.msk [vmem:[#allocation3 + $0x18] sm:$0xff] %vm1553, %v1512
      %1558 = vst.msk [vmem:[#allocation3 + $0x20] sm:$0xff] %vm1553, %v1514
      %1559 = vst.msk [vmem:[#allocation3 + $0x28] sm:$0xff] %vm1553, %v1516
      %1560 = vst.msk [vmem:[#allocation3 + $0x30] sm:$0xff] %vm1553, %v1518
      %1561 = vst.msk [vmem:[#allocation3 + $0x38] sm:$0xff] %vm1553, %v1520
      %1562 = vst.msk [vmem:[#allocation3 + $0x40] sm:$0xff] %vm1553, %v1522
      %1563 = vst.msk [vmem:[#allocation3 + $0x48] sm:$0xff] %vm1553, %v1524
      %1564 = vst.msk [vmem:[#allocation3 + $0x50] sm:$0xff] %vm1553, %v1526
      %1565 = vst.msk [vmem:[#allocation3 + $0x58] sm:$0xff] %vm1553, %v1528
      %1566 = vst.msk [vmem:[#allocation3 + $0x60] sm:$0xff] %vm1553, %v1530
      %1567 = vst.msk [vmem:[#allocation3 + $0x68] sm:$0xff] %vm1553, %v1532
      %1568 = vst.msk [vmem:[#allocation3 + $0x70] sm:$0xff] %vm1553, %v1534
      %1569 = vst.msk [vmem:[#allocation3 + $0x78] sm:$0xff] %vm1553, %v1536
      %v1570 = vld [vmem:[%s583] sm:$0xf]
      %v1571 = vld [vmem:[%s583 + $0x4] sm:$0xf]
      %v1572 = vld [vmem:[%s583 + $0xc] sm:$0xf]
      %v1573 = vld [vmem:[%s583 + $0x10] sm:$0xf]
      %v1574 = vld [vmem:[%s583 + $0x18] sm:$0xf]
      %v1575 = vld [vmem:[%s583 + $0x1c] sm:$0xf]
      %v1576 = vld [vmem:[%s583 + $0x24] sm:$0xf]
      %v1577 = vld [vmem:[%s583 + $0x28] sm:$0xf]
      %v1578 = vld [vmem:[%s583 + $0x30] sm:$0xf]
      %v1579 = vld [vmem:[%s583 + $0x34] sm:$0xf]
      %v1580 = vld [vmem:[%s583 + $0x3c] sm:$0xf]
      %v1581 = vld [vmem:[%s583 + $0x40] sm:$0xf]
      %v1582 = vld [vmem:[%s583 + $0x48] sm:$0xf]
      %v1583 = vld [vmem:[%s583 + $0x4c] sm:$0xf]
      %v1584 = vld [vmem:[%s583 + $0x54] sm:$0xf]
      %v1585 = vld [vmem:[%s583 + $0x58] sm:$0xf]
      %v1586 = vld [vmem:[%s583 + $0x60] sm:$0xf]
      %v1587 = vld [vmem:[%s583 + $0x64] sm:$0xf]
      %v1588 = vld [vmem:[%s583 + $0x6c] sm:$0xf]
      %v1589 = vld [vmem:[%s583 + $0x70] sm:$0xf]
      %v1590 = vld [vmem:[%s583 + $0x78] sm:$0xf]
      %v1591 = vld [vmem:[%s583 + $0x7c] sm:$0xf]
      %v1592 = vld [vmem:[%s583 + $0x84] sm:$0xf]
      %v1593 = vld [vmem:[%s583 + $0x88] sm:$0xf]
      %v1594 = vld [vmem:[%s583 + $0x90] sm:$0xf]
      %v1595 = vld [vmem:[%s583 + $0x94] sm:$0xf]
      %v1596 = vld [vmem:[%s583 + $0x9c] sm:$0xf]
      %v1597 = vld [vmem:[%s583 + $0xa0] sm:$0xf]
      %v1598 = vld [vmem:[%s583 + $0xa8] sm:$0xf]
      %v1599 = vld [vmem:[%s583 + $0xac] sm:$0xf]
      %v1600 = vld [vmem:[%s583 + $0xb4] sm:$0xf]
      %v1601 = vld [vmem:[%s583 + $0xb8] sm:$0xf]
      %v1634 = vunpack.c.l.b16 %v1570
      %v1635 = vunpack.c.l.b16 %v1571
      %v1636 = vunpack.c.l.b16 %v1572
      %v1637 = vunpack.c.l.b16 %v1573
      %v1638 = vunpack.c.l.b16 %v1574
      %v1639 = vunpack.c.l.b16 %v1575
      %v1640 = vunpack.c.l.b16 %v1576
      %v1641 = vunpack.c.l.b16 %v1577
      %v1642 = vunpack.c.l.b16 %v1578
      %v1643 = vunpack.c.l.b16 %v1579
      %v1644 = vunpack.c.l.b16 %v1580
      %v1645 = vunpack.c.l.b16 %v1581
      %v1646 = vunpack.c.l.b16 %v1582
      %v1647 = vunpack.c.l.b16 %v1583
      %v1648 = vunpack.c.l.b16 %v1584
      %v1649 = vunpack.c.l.b16 %v1585
      %v1650 = vunpack.c.l.b16 %v1586
      %v1651 = vunpack.c.l.b16 %v1587
      %v1652 = vunpack.c.l.b16 %v1588
      %v1653 = vunpack.c.l.b16 %v1589
      %v1654 = vunpack.c.l.b16 %v1590
      %v1655 = vunpack.c.l.b16 %v1591
      %v1656 = vunpack.c.l.b16 %v1592
      %v1657 = vunpack.c.l.b16 %v1593
      %v1658 = vunpack.c.l.b16 %v1594
      %v1659 = vunpack.c.l.b16 %v1595
      %v1660 = vunpack.c.l.b16 %v1596
      %v1661 = vunpack.c.l.b16 %v1597
      %v1662 = vunpack.c.l.b16 %v1598
      %v1663 = vunpack.c.l.b16 %v1599
      %v1664 = vunpack.c.l.b16 %v1600
      %v1665 = vunpack.c.l.b16 %v1601
      %v1666 = vpack.c.b16 %v1635, %v1634
      %v1667 = vpack.c.b16 %v1637, %v1636
      %v1668 = vpack.c.b16 %v1639, %v1638
      %v1669 = vpack.c.b16 %v1641, %v1640
      %v1670 = vpack.c.b16 %v1643, %v1642
      %v1671 = vpack.c.b16 %v1645, %v1644
      %v1672 = vpack.c.b16 %v1647, %v1646
      %v1673 = vpack.c.b16 %v1649, %v1648
      %v1674 = vpack.c.b16 %v1651, %v1650
      %v1675 = vpack.c.b16 %v1653, %v1652
      %v1676 = vpack.c.b16 %v1655, %v1654
      %v1677 = vpack.c.b16 %v1657, %v1656
      %v1678 = vpack.c.b16 %v1659, %v1658
      %v1679 = vpack.c.b16 %v1661, %v1660
      %v1680 = vpack.c.b16 %v1663, %v1662
      %v1681 = vpack.c.b16 %v1665, %v1664
      %1682 = vrot.lane.b32.xlu0 %v1666, 12
      %v1683 = vpop.permute.xlu0 %1682
      %1684 = vrot.lane.b32.xlu0 %v1667, 12
      %v1685 = vpop.permute.xlu0 %1684
      %1686 = vrot.lane.b32.xlu0 %v1668, 12
      %v1687 = vpop.permute.xlu0 %1686
      %1688 = vrot.lane.b32.xlu0 %v1669, 12
      %v1689 = vpop.permute.xlu0 %1688
      %1690 = vrot.lane.b32.xlu0 %v1670, 12
      %v1691 = vpop.permute.xlu0 %1690
      %1692 = vrot.lane.b32.xlu0 %v1671, 12
      %v1693 = vpop.permute.xlu0 %1692
      %1694 = vrot.lane.b32.xlu0 %v1672, 12
      %v1695 = vpop.permute.xlu0 %1694
      %1696 = vrot.lane.b32.xlu0 %v1673, 12
      %v1697 = vpop.permute.xlu0 %1696
      %1698 = vrot.lane.b32.xlu0 %v1674, 12
      %v1699 = vpop.permute.xlu0 %1698
      %1700 = vrot.lane.b32.xlu0 %v1675, 12
      %v1701 = vpop.permute.xlu0 %1700
      %1702 = vrot.lane.b32.xlu0 %v1676, 12
      %v1703 = vpop.permute.xlu0 %1702
      %1704 = vrot.lane.b32.xlu0 %v1677, 12
      %v1705 = vpop.permute.xlu0 %1704
      %1706 = vrot.lane.b32.xlu0 %v1678, 12
      %v1707 = vpop.permute.xlu0 %1706
      %1708 = vrot.lane.b32.xlu0 %v1679, 12
      %v1709 = vpop.permute.xlu0 %1708
      %1710 = vrot.lane.b32.xlu0 %v1680, 12
      %v1711 = vpop.permute.xlu0 %1710
      %1712 = vrot.lane.b32.xlu0 %v1681, 12
      %v1713 = vpop.permute.xlu0 %1712
      %vm1730 = vcmask 130144
      %1731 = vst.msk [vmem:[#allocation3] sm:$0xff] %vm1730, %v1683
      %1732 = vst.msk [vmem:[#allocation3 + $0x8] sm:$0xff] %vm1730, %v1685
      %1733 = vst.msk [vmem:[#allocation3 + $0x10] sm:$0xff] %vm1730, %v1687
      %1734 = vst.msk [vmem:[#allocation3 + $0x18] sm:$0xff] %vm1730, %v1689
      %1735 = vst.msk [vmem:[#allocation3 + $0x20] sm:$0xff] %vm1730, %v1691
      %1736 = vst.msk [vmem:[#allocation3 + $0x28] sm:$0xff] %vm1730, %v1693
      %1737 = vst.msk [vmem:[#allocation3 + $0x30] sm:$0xff] %vm1730, %v1695
      %1738 = vst.msk [vmem:[#allocation3 + $0x38] sm:$0xff] %vm1730, %v1697
      %1739 = vst.msk [vmem:[#allocation3 + $0x40] sm:$0xff] %vm1730, %v1699
      %1740 = vst.msk [vmem:[#allocation3 + $0x48] sm:$0xff] %vm1730, %v1701
      %1741 = vst.msk [vmem:[#allocation3 + $0x50] sm:$0xff] %vm1730, %v1703
      %1742 = vst.msk [vmem:[#allocation3 + $0x58] sm:$0xff] %vm1730, %v1705
      %1743 = vst.msk [vmem:[#allocation3 + $0x60] sm:$0xff] %vm1730, %v1707
      %1744 = vst.msk [vmem:[#allocation3 + $0x68] sm:$0xff] %vm1730, %v1709
      %1745 = vst.msk [vmem:[#allocation3 + $0x70] sm:$0xff] %vm1730, %v1711
      %1746 = vst.msk [vmem:[#allocation3 + $0x78] sm:$0xff] %vm1730, %v1713
      %v1747 = vld [vmem:[%s583] sm:$0xf]
      %v1748 = vld [vmem:[%s583 + $0x4] sm:$0xf]
      %v1749 = vld [vmem:[%s583 + $0x8] sm:$0x1]
      %v1750 = vld [vmem:[%s583 + $0xc] sm:$0xf]
      %v1751 = vld [vmem:[%s583 + $0x10] sm:$0xf]
      %v1752 = vld [vmem:[%s583 + $0x14] sm:$0x1]
      %v1753 = vld [vmem:[%s583 + $0x18] sm:$0xf]
      %v1754 = vld [vmem:[%s583 + $0x1c] sm:$0xf]
      %v1755 = vld [vmem:[%s583 + $0x20] sm:$0x1]
      %v1756 = vld [vmem:[%s583 + $0x24] sm:$0xf]
      %v1757 = vld [vmem:[%s583 + $0x28] sm:$0xf]
      %v1758 = vld [vmem:[%s583 + $0x2c] sm:$0x1]
      %v1759 = vld [vmem:[%s583 + $0x30] sm:$0xf]
      %v1760 = vld [vmem:[%s583 + $0x34] sm:$0xf]
      %v1761 = vld [vmem:[%s583 + $0x38] sm:$0x1]
      %v1762 = vld [vmem:[%s583 + $0x3c] sm:$0xf]
      %v1763 = vld [vmem:[%s583 + $0x40] sm:$0xf]
      %v1764 = vld [vmem:[%s583 + $0x44] sm:$0x1]
      %v1765 = vld [vmem:[%s583 + $0x48] sm:$0xf]
      %v1766 = vld [vmem:[%s583 + $0x4c] sm:$0xf]
      %v1767 = vld [vmem:[%s583 + $0x50] sm:$0x1]
      %v1768 = vld [vmem:[%s583 + $0x54] sm:$0xf]
      %v1769 = vld [vmem:[%s583 + $0x58] sm:$0xf]
      %v1770 = vld [vmem:[%s583 + $0x5c] sm:$0x1]
      %v1771 = vld [vmem:[%s583 + $0x60] sm:$0xf]
      %v1772 = vld [vmem:[%s583 + $0x64] sm:$0xf]
      %v1773 = vld [vmem:[%s583 + $0x68] sm:$0x1]
      %v1774 = vld [vmem:[%s583 + $0x6c] sm:$0xf]
      %v1775 = vld [vmem:[%s583 + $0x70] sm:$0xf]
      %v1776 = vld [vmem:[%s583 + $0x74] sm:$0x1]
      %v1777 = vld [vmem:[%s583 + $0x78] sm:$0xf]
      %v1778 = vld [vmem:[%s583 + $0x7c] sm:$0xf]
      %v1779 = vld [vmem:[%s583 + $0x80] sm:$0x1]
      %v1780 = vld [vmem:[%s583 + $0x84] sm:$0xf]
      %v1781 = vld [vmem:[%s583 + $0x88] sm:$0xf]
      %v1782 = vld [vmem:[%s583 + $0x8c] sm:$0x1]
      %v1783 = vld [vmem:[%s583 + $0x90] sm:$0xf]
      %v1784 = vld [vmem:[%s583 + $0x94] sm:$0xf]
      %v1785 = vld [vmem:[%s583 + $0x98] sm:$0x1]
      %v1786 = vld [vmem:[%s583 + $0x9c] sm:$0xf]
      %v1787 = vld [vmem:[%s583 + $0xa0] sm:$0xf]
      %v1788 = vld [vmem:[%s583 + $0xa4] sm:$0x1]
      %v1789 = vld [vmem:[%s583 + $0xa8] sm:$0xf]
      %v1790 = vld [vmem:[%s583 + $0xac] sm:$0xf]
      %v1791 = vld [vmem:[%s583 + $0xb0] sm:$0x1]
      %v1792 = vld [vmem:[%s583 + $0xb4] sm:$0xf]
      %v1793 = vld [vmem:[%s583 + $0xb8] sm:$0xf]
      %v1794 = vld [vmem:[%s583 + $0xbc] sm:$0x1]
      %v1843 = vunpack.c.l.b16 %v1747
      %v1844 = vunpack.c.l.b16 %v1748
      %v1845 = vunpack.c.l.b16 %v1749
      %v1846 = vunpack.c.l.b16 %v1750
      %v1847 = vunpack.c.l.b16 %v1751
      %v1848 = vunpack.c.l.b16 %v1752
      %v1849 = vunpack.c.l.b16 %v1753
      %v1850 = vunpack.c.l.b16 %v1754
      %v1851 = vunpack.c.l.b16 %v1755
      %v1852 = vunpack.c.l.b16 %v1756
      %v1853 = vunpack.c.l.b16 %v1757
      %v1854 = vunpack.c.l.b16 %v1758
      %v1855 = vunpack.c.l.b16 %v1759
      %v1856 = vunpack.c.l.b16 %v1760
      %v1857 = vunpack.c.l.b16 %v1761
      %v1858 = vunpack.c.l.b16 %v1762
      %v1859 = vunpack.c.l.b16 %v1763
      %v1860 = vunpack.c.l.b16 %v1764
      %v1861 = vunpack.c.l.b16 %v1765
      %v1862 = vunpack.c.l.b16 %v1766
      %v1863 = vunpack.c.l.b16 %v1767
      %v1864 = vunpack.c.l.b16 %v1768
      %v1865 = vunpack.c.l.b16 %v1769
      %v1866 = vunpack.c.l.b16 %v1770
      %v1867 = vunpack.c.l.b16 %v1771
      %v1868 = vunpack.c.l.b16 %v1772
      %v1869 = vunpack.c.l.b16 %v1773
      %v1870 = vunpack.c.l.b16 %v1774
      %v1871 = vunpack.c.l.b16 %v1775
      %v1872 = vunpack.c.l.b16 %v1776
      %v1873 = vunpack.c.l.b16 %v1777
      %v1874 = vunpack.c.l.b16 %v1778
      %v1875 = vunpack.c.l.b16 %v1779
      %v1876 = vunpack.c.l.b16 %v1780
      %v1877 = vunpack.c.l.b16 %v1781
      %v1878 = vunpack.c.l.b16 %v1782
      %v1879 = vunpack.c.l.b16 %v1783
      %v1880 = vunpack.c.l.b16 %v1784
      %v1881 = vunpack.c.l.b16 %v1785
      %v1882 = vunpack.c.l.b16 %v1786
      %v1883 = vunpack.c.l.b16 %v1787
      %v1884 = vunpack.c.l.b16 %v1788
      %v1885 = vunpack.c.l.b16 %v1789
      %v1886 = vunpack.c.l.b16 %v1790
      %v1887 = vunpack.c.l.b16 %v1791
      %v1888 = vunpack.c.l.b16 %v1792
      %v1889 = vunpack.c.l.b16 %v1793
      %v1890 = vunpack.c.l.b16 %v1794
      %v1891 = vpack.c.b16 %v1844, %v1843
      %v1892 = vpack.c.b16 %v1845, %v1845
      %v1893 = vpack.c.b16 %v1847, %v1846
      %v1894 = vpack.c.b16 %v1848, %v1848
      %v1895 = vpack.c.b16 %v1850, %v1849
      %v1896 = vpack.c.b16 %v1851, %v1851
      %v1897 = vpack.c.b16 %v1853, %v1852
      %v1898 = vpack.c.b16 %v1854, %v1854
      %v1899 = vpack.c.b16 %v1856, %v1855
      %v1900 = vpack.c.b16 %v1857, %v1857
      %v1901 = vpack.c.b16 %v1859, %v1858
      %v1902 = vpack.c.b16 %v1860, %v1860
      %v1903 = vpack.c.b16 %v1862, %v1861
      %v1904 = vpack.c.b16 %v1863, %v1863
      %v1905 = vpack.c.b16 %v1865, %v1864
      %v1906 = vpack.c.b16 %v1866, %v1866
      %v1907 = vpack.c.b16 %v1868, %v1867
      %v1908 = vpack.c.b16 %v1869, %v1869
      %v1909 = vpack.c.b16 %v1871, %v1870
      %v1910 = vpack.c.b16 %v1872, %v1872
      %v1911 = vpack.c.b16 %v1874, %v1873
      %v1912 = vpack.c.b16 %v1875, %v1875
      %v1913 = vpack.c.b16 %v1877, %v1876
      %v1914 = vpack.c.b16 %v1878, %v1878
      %v1915 = vpack.c.b16 %v1880, %v1879
      %v1916 = vpack.c.b16 %v1881, %v1881
      %v1917 = vpack.c.b16 %v1883, %v1882
      %v1918 = vpack.c.b16 %v1884, %v1884
      %v1919 = vpack.c.b16 %v1886, %v1885
      %v1920 = vpack.c.b16 %v1887, %v1887
      %v1921 = vpack.c.b16 %v1889, %v1888
      %v1922 = vpack.c.b16 %v1890, %v1890
      %v1924 = vshrl.u32 %v1891, 16
      %v1926 = vshll.u32 %v1891, 16
      %v1928 = vrot.slane %v1926, 1
      %v1929 = vor.u32 %v1924, %v1928
      %v1931 = vshll.u32 %v1892, 16
      %v1933 = vrot.slane %v1931, 1
      %v1934 = vsel %vm1022, %v1929, %v1933
      %v1936 = vshrl.u32 %v1893, 16
      %v1938 = vshll.u32 %v1893, 16
      %v1940 = vrot.slane %v1938, 1
      %v1941 = vor.u32 %v1936, %v1940
      %v1943 = vshll.u32 %v1894, 16
      %v1945 = vrot.slane %v1943, 1
      %v1946 = vsel %vm1022, %v1941, %v1945
      %v1948 = vshrl.u32 %v1895, 16
      %v1950 = vshll.u32 %v1895, 16
      %v1952 = vrot.slane %v1950, 1
      %v1953 = vor.u32 %v1948, %v1952
      %v1955 = vshll.u32 %v1896, 16
      %v1957 = vrot.slane %v1955, 1
      %v1958 = vsel %vm1022, %v1953, %v1957
      %v1960 = vshrl.u32 %v1897, 16
      %v1962 = vshll.u32 %v1897, 16
      %v1964 = vrot.slane %v1962, 1
      %v1965 = vor.u32 %v1960, %v1964
      %v1967 = vshll.u32 %v1898, 16
      %v1969 = vrot.slane %v1967, 1
      %v1970 = vsel %vm1022, %v1965, %v1969
      %v1972 = vshrl.u32 %v1899, 16
      %v1974 = vshll.u32 %v1899, 16
      %v1976 = vrot.slane %v1974, 1
      %v1977 = vor.u32 %v1972, %v1976
      %v1979 = vshll.u32 %v1900, 16
      %v1981 = vrot.slane %v1979, 1
      %v1982 = vsel %vm1022, %v1977, %v1981
      %v1984 = vshrl.u32 %v1901, 16
      %v1986 = vshll.u32 %v1901, 16
      %v1988 = vrot.slane %v1986, 1
      %v1989 = vor.u32 %v1984, %v1988
      %v1991 = vshll.u32 %v1902, 16
      %v1993 = vrot.slane %v1991, 1
      %v1994 = vsel %vm1022, %v1989, %v1993
      %v1996 = vshrl.u32 %v1903, 16
      %v1998 = vshll.u32 %v1903, 16
      %v2000 = vrot.slane %v1998, 1
      %v2001 = vor.u32 %v1996, %v2000
      %v2003 = vshll.u32 %v1904, 16
      %v2005 = vrot.slane %v2003, 1
      %v2006 = vsel %vm1022, %v2001, %v2005
      %v2008 = vshrl.u32 %v1905, 16
      %v2010 = vshll.u32 %v1905, 16
      %v2012 = vrot.slane %v2010, 1
      %v2013 = vor.u32 %v2008, %v2012
      %v2015 = vshll.u32 %v1906, 16
      %v2017 = vrot.slane %v2015, 1
      %v2018 = vsel %vm1022, %v2013, %v2017
      %v2020 = vshrl.u32 %v1907, 16
      %v2022 = vshll.u32 %v1907, 16
      %v2024 = vrot.slane %v2022, 1
      %v2025 = vor.u32 %v2020, %v2024
      %v2027 = vshll.u32 %v1908, 16
      %v2029 = vrot.slane %v2027, 1
      %v2030 = vsel %vm1022, %v2025, %v2029
      %v2032 = vshrl.u32 %v1909, 16
      %v2034 = vshll.u32 %v1909, 16
      %v2036 = vrot.slane %v2034, 1
      %v2037 = vor.u32 %v2032, %v2036
      %v2039 = vshll.u32 %v1910, 16
      %v2041 = vrot.slane %v2039, 1
      %v2042 = vsel %vm1022, %v2037, %v2041
      %v2044 = vshrl.u32 %v1911, 16
      %v2046 = vshll.u32 %v1911, 16
      %v2048 = vrot.slane %v2046, 1
      %v2049 = vor.u32 %v2044, %v2048
      %v2051 = vshll.u32 %v1912, 16
      %v2053 = vrot.slane %v2051, 1
      %v2054 = vsel %vm1022, %v2049, %v2053
      %v2056 = vshrl.u32 %v1913, 16
      %v2058 = vshll.u32 %v1913, 16
      %v2060 = vrot.slane %v2058, 1
      %v2061 = vor.u32 %v2056, %v2060
      %v2063 = vshll.u32 %v1914, 16
      %v2065 = vrot.slane %v2063, 1
      %v2066 = vsel %vm1022, %v2061, %v2065
      %v2068 = vshrl.u32 %v1915, 16
      %v2070 = vshll.u32 %v1915, 16
      %v2072 = vrot.slane %v2070, 1
      %v2073 = vor.u32 %v2068, %v2072
      %v2075 = vshll.u32 %v1916, 16
      %v2077 = vrot.slane %v2075, 1
      %v2078 = vsel %vm1022, %v2073, %v2077
      %v2080 = vshrl.u32 %v1917, 16
      %v2082 = vshll.u32 %v1917, 16
      %v2084 = vrot.slane %v2082, 1
      %v2085 = vor.u32 %v2080, %v2084
      %v2087 = vshll.u32 %v1918, 16
      %v2089 = vrot.slane %v2087, 1
      %v2090 = vsel %vm1022, %v2085, %v2089
      %v2092 = vshrl.u32 %v1919, 16
      %v2094 = vshll.u32 %v1919, 16
      %v2096 = vrot.slane %v2094, 1
      %v2097 = vor.u32 %v2092, %v2096
      %v2099 = vshll.u32 %v1920, 16
      %v2101 = vrot.slane %v2099, 1
      %v2102 = vsel %vm1022, %v2097, %v2101
      %v2104 = vshrl.u32 %v1921, 16
      %v2106 = vshll.u32 %v1921, 16
      %v2108 = vrot.slane %v2106, 1
      %v2109 = vor.u32 %v2104, %v2108
      %v2111 = vshll.u32 %v1922, 16
      %v2113 = vrot.slane %v2111, 1
      %v2114 = vsel %vm1022, %v2109, %v2113
      %2115 = vrot.lane.b32.xlu0 %v1934, 16
      %v2116 = vpop.permute.xlu0 %2115
      %2117 = vrot.lane.b32.xlu0 %v1946, 16
      %v2118 = vpop.permute.xlu0 %2117
      %2119 = vrot.lane.b32.xlu0 %v1958, 16
      %v2120 = vpop.permute.xlu0 %2119
      %2121 = vrot.lane.b32.xlu0 %v1970, 16
      %v2122 = vpop.permute.xlu0 %2121
      %2123 = vrot.lane.b32.xlu0 %v1982, 16
      %v2124 = vpop.permute.xlu0 %2123
      %2125 = vrot.lane.b32.xlu0 %v1994, 16
      %v2126 = vpop.permute.xlu0 %2125
      %2127 = vrot.lane.b32.xlu0 %v2006, 16
      %v2128 = vpop.permute.xlu0 %2127
      %2129 = vrot.lane.b32.xlu0 %v2018, 16
      %v2130 = vpop.permute.xlu0 %2129
      %2131 = vrot.lane.b32.xlu0 %v2030, 16
      %v2132 = vpop.permute.xlu0 %2131
      %2133 = vrot.lane.b32.xlu0 %v2042, 16
      %v2134 = vpop.permute.xlu0 %2133
      %2135 = vrot.lane.b32.xlu0 %v2054, 16
      %v2136 = vpop.permute.xlu0 %2135
      %2137 = vrot.lane.b32.xlu0 %v2066, 16
      %v2138 = vpop.permute.xlu0 %2137
      %2139 = vrot.lane.b32.xlu0 %v2078, 16
      %v2140 = vpop.permute.xlu0 %2139
      %2141 = vrot.lane.b32.xlu0 %v2090, 16
      %v2142 = vpop.permute.xlu0 %2141
      %2143 = vrot.lane.b32.xlu0 %v2102, 16
      %v2144 = vpop.permute.xlu0 %2143
      %2145 = vrot.lane.b32.xlu0 %v2114, 16
      %v2146 = vpop.permute.xlu0 %2145
      %vm2163 = vcmask 162944
      %2164 = vst.msk [vmem:[#allocation3] sm:$0xff] %vm2163, %v2116
      %2165 = vst.msk [vmem:[#allocation3 + $0x8] sm:$0xff] %vm2163, %v2118
      %2166 = vst.msk [vmem:[#allocation3 + $0x10] sm:$0xff] %vm2163, %v2120
      %2167 = vst.msk [vmem:[#allocation3 + $0x18] sm:$0xff] %vm2163, %v2122
      %2168 = vst.msk [vmem:[#allocation3 + $0x20] sm:$0xff] %vm2163, %v2124
      %2169 = vst.msk [vmem:[#allocation3 + $0x28] sm:$0xff] %vm2163, %v2126
      %2170 = vst.msk [vmem:[#allocation3 + $0x30] sm:$0xff] %vm2163, %v2128
      %2171 = vst.msk [vmem:[#allocation3 + $0x38] sm:$0xff] %vm2163, %v2130
      %2172 = vst.msk [vmem:[#allocation3 + $0x40] sm:$0xff] %vm2163, %v2132
      %2173 = vst.msk [vmem:[#allocation3 + $0x48] sm:$0xff] %vm2163, %v2134
      %2174 = vst.msk [vmem:[#allocation3 + $0x50] sm:$0xff] %vm2163, %v2136
      %2175 = vst.msk [vmem:[#allocation3 + $0x58] sm:$0xff] %vm2163, %v2138
      %2176 = vst.msk [vmem:[#allocation3 + $0x60] sm:$0xff] %vm2163, %v2140
      %2177 = vst.msk [vmem:[#allocation3 + $0x68] sm:$0xff] %vm2163, %v2142
      %2178 = vst.msk [vmem:[#allocation3 + $0x70] sm:$0xff] %vm2163, %v2144
      %2179 = vst.msk [vmem:[#allocation3 + $0x78] sm:$0xff] %vm2163, %v2146
      %v2180 = vld [vmem:[%s583] sm:$0xe]
      %v2181 = vld [vmem:[%s583 + $0x4] sm:$0xf]
      %v2182 = vld [vmem:[%s583 + $0x8] sm:$0x1]
      %v2183 = vld [vmem:[%s583 + $0xc] sm:$0xe]
      %v2184 = vld [vmem:[%s583 + $0x10] sm:$0xf]
      %v2185 = vld [vmem:[%s583 + $0x14] sm:$0x1]
      %v2186 = vld [vmem:[%s583 + $0x18] sm:$0xe]
      %v2187 = vld [vmem:[%s583 + $0x1c] sm:$0xf]
      %v2188 = vld [vmem:[%s583 + $0x20] sm:$0x1]
      %v2189 = vld [vmem:[%s583 + $0x24] sm:$0xe]
      %v2190 = vld [vmem:[%s583 + $0x28] sm:$0xf]
      %v2191 = vld [vmem:[%s583 + $0x2c] sm:$0x1]
      %v2192 = vld [vmem:[%s583 + $0x30] sm:$0xe]
      %v2193 = vld [vmem:[%s583 + $0x34] sm:$0xf]
      %v2194 = vld [vmem:[%s583 + $0x38] sm:$0x1]
      %v2195 = vld [vmem:[%s583 + $0x3c] sm:$0xe]
      %v2196 = vld [vmem:[%s583 + $0x40] sm:$0xf]
      %v2197 = vld [vmem:[%s583 + $0x44] sm:$0x1]
      %v2198 = vld [vmem:[%s583 + $0x48] sm:$0xe]
      %v2199 = vld [vmem:[%s583 + $0x4c] sm:$0xf]
      %v2200 = vld [vmem:[%s583 + $0x50] sm:$0x1]
      %v2201 = vld [vmem:[%s583 + $0x54] sm:$0xe]
      %v2202 = vld [vmem:[%s583 + $0x58] sm:$0xf]
      %v2203 = vld [vmem:[%s583 + $0x5c] sm:$0x1]
      %v2204 = vld [vmem:[%s583 + $0x60] sm:$0xe]
      %v2205 = vld [vmem:[%s583 + $0x64] sm:$0xf]
      %v2206 = vld [vmem:[%s583 + $0x68] sm:$0x1]
      %v2207 = vld [vmem:[%s583 + $0x6c] sm:$0xe]
      %v2208 = vld [vmem:[%s583 + $0x70] sm:$0xf]
      %v2209 = vld [vmem:[%s583 + $0x74] sm:$0x1]
      %v2210 = vld [vmem:[%s583 + $0x78] sm:$0xe]
      %v2211 = vld [vmem:[%s583 + $0x7c] sm:$0xf]
      %v2212 = vld [vmem:[%s583 + $0x80] sm:$0x1]
      %v2213 = vld [vmem:[%s583 + $0x84] sm:$0xe]
      %v2214 = vld [vmem:[%s583 + $0x88] sm:$0xf]
      %v2215 = vld [vmem:[%s583 + $0x8c] sm:$0x1]
      %v2216 = vld [vmem:[%s583 + $0x90] sm:$0xe]
      %v2217 = vld [vmem:[%s583 + $0x94] sm:$0xf]
      %v2218 = vld [vmem:[%s583 + $0x98] sm:$0x1]
      %v2219 = vld [vmem:[%s583 + $0x9c] sm:$0xe]
      %v2220 = vld [vmem:[%s583 + $0xa0] sm:$0xf]
      %v2221 = vld [vmem:[%s583 + $0xa4] sm:$0x1]
      %v2222 = vld [vmem:[%s583 + $0xa8] sm:$0xe]
      %v2223 = vld [vmem:[%s583 + $0xac] sm:$0xf]
      %v2224 = vld [vmem:[%s583 + $0xb0] sm:$0x1]
      %v2225 = vld [vmem:[%s583 + $0xb4] sm:$0xe]
      %v2226 = vld [vmem:[%s583 + $0xb8] sm:$0xf]
      %v2227 = vld [vmem:[%s583 + $0xbc] sm:$0x1]
      %v2276 = vunpack.c.l.b16 %v2180
      %v2277 = vunpack.c.l.b16 %v2181
      %v2278 = vunpack.c.l.b16 %v2182
      %v2279 = vunpack.c.l.b16 %v2183
      %v2280 = vunpack.c.l.b16 %v2184
      %v2281 = vunpack.c.l.b16 %v2185
      %v2282 = vunpack.c.l.b16 %v2186
      %v2283 = vunpack.c.l.b16 %v2187
      %v2284 = vunpack.c.l.b16 %v2188
      %v2285 = vunpack.c.l.b16 %v2189
      %v2286 = vunpack.c.l.b16 %v2190
      %v2287 = vunpack.c.l.b16 %v2191
      %v2288 = vunpack.c.l.b16 %v2192
      %v2289 = vunpack.c.l.b16 %v2193
      %v2290 = vunpack.c.l.b16 %v2194
      %v2291 = vunpack.c.l.b16 %v2195
      %v2292 = vunpack.c.l.b16 %v2196
      %v2293 = vunpack.c.l.b16 %v2197
      %v2294 = vunpack.c.l.b16 %v2198
      %v2295 = vunpack.c.l.b16 %v2199
      %v2296 = vunpack.c.l.b16 %v2200
      %v2297 = vunpack.c.l.b16 %v2201
      %v2298 = vunpack.c.l.b16 %v2202
      %v2299 = vunpack.c.l.b16 %v2203
      %v2300 = vunpack.c.l.b16 %v2204
      %v2301 = vunpack.c.l.b16 %v2205
      %v2302 = vunpack.c.l.b16 %v2206
      %v2303 = vunpack.c.l.b16 %v2207
      %v2304 = vunpack.c.l.b16 %v2208
      %v2305 = vunpack.c.l.b16 %v2209
      %v2306 = vunpack.c.l.b16 %v2210
      %v2307 = vunpack.c.l.b16 %v2211
      %v2308 = vunpack.c.l.b16 %v2212
      %v2309 = vunpack.c.l.b16 %v2213
      %v2310 = vunpack.c.l.b16 %v2214
      %v2311 = vunpack.c.l.b16 %v2215
      %v2312 = vunpack.c.l.b16 %v2216
      %v2313 = vunpack.c.l.b16 %v2217
      %v2314 = vunpack.c.l.b16 %v2218
      %v2315 = vunpack.c.l.b16 %v2219
      %v2316 = vunpack.c.l.b16 %v2220
      %v2317 = vunpack.c.l.b16 %v2221
      %v2318 = vunpack.c.l.b16 %v2222
      %v2319 = vunpack.c.l.b16 %v2223
      %v2320 = vunpack.c.l.b16 %v2224
      %v2321 = vunpack.c.l.b16 %v2225
      %v2322 = vunpack.c.l.b16 %v2226
      %v2323 = vunpack.c.l.b16 %v2227
      %v2324 = vpack.c.b16 %v2277, %v2276
      %v2325 = vpack.c.b16 %v2278, %v2278
      %v2326 = vpack.c.b16 %v2280, %v2279
      %v2327 = vpack.c.b16 %v2281, %v2281
      %v2328 = vpack.c.b16 %v2283, %v2282
      %v2329 = vpack.c.b16 %v2284, %v2284
      %v2330 = vpack.c.b16 %v2286, %v2285
      %v2331 = vpack.c.b16 %v2287, %v2287
      %v2332 = vpack.c.b16 %v2289, %v2288
      %v2333 = vpack.c.b16 %v2290, %v2290
      %v2334 = vpack.c.b16 %v2292, %v2291
      %v2335 = vpack.c.b16 %v2293, %v2293
      %v2336 = vpack.c.b16 %v2295, %v2294
      %v2337 = vpack.c.b16 %v2296, %v2296
      %v2338 = vpack.c.b16 %v2298, %v2297
      %v2339 = vpack.c.b16 %v2299, %v2299
      %v2340 = vpack.c.b16 %v2301, %v2300
      %v2341 = vpack.c.b16 %v2302, %v2302
      %v2342 = vpack.c.b16 %v2304, %v2303
      %v2343 = vpack.c.b16 %v2305, %v2305
      %v2344 = vpack.c.b16 %v2307, %v2306
      %v2345 = vpack.c.b16 %v2308, %v2308
      %v2346 = vpack.c.b16 %v2310, %v2309
      %v2347 = vpack.c.b16 %v2311, %v2311
      %v2348 = vpack.c.b16 %v2313, %v2312
      %v2349 = vpack.c.b16 %v2314, %v2314
      %v2350 = vpack.c.b16 %v2316, %v2315
      %v2351 = vpack.c.b16 %v2317, %v2317
      %v2352 = vpack.c.b16 %v2319, %v2318
      %v2353 = vpack.c.b16 %v2320, %v2320
      %v2354 = vpack.c.b16 %v2322, %v2321
      %v2355 = vpack.c.b16 %v2323, %v2323
      %v2356 = vrot.slane %v2324, 1
      %v2357 = vrot.slane %v2325, 1
      %v2358 = vsel %vm1456, %v2356, %v2357
      %v2359 = vrot.slane %v2326, 1
      %v2360 = vrot.slane %v2327, 1
      %v2361 = vsel %vm1456, %v2359, %v2360
      %v2362 = vrot.slane %v2328, 1
      %v2363 = vrot.slane %v2329, 1
      %v2364 = vsel %vm1456, %v2362, %v2363
      %v2365 = vrot.slane %v2330, 1
      %v2366 = vrot.slane %v2331, 1
      %v2367 = vsel %vm1456, %v2365, %v2366
      %v2368 = vrot.slane %v2332, 1
      %v2369 = vrot.slane %v2333, 1
      %v2370 = vsel %vm1456, %v2368, %v2369
      %v2371 = vrot.slane %v2334, 1
      %v2372 = vrot.slane %v2335, 1
      %v2373 = vsel %vm1456, %v2371, %v2372
      %v2374 = vrot.slane %v2336, 1
      %v2375 = vrot.slane %v2337, 1
      %v2376 = vsel %vm1456, %v2374, %v2375
      %v2377 = vrot.slane %v2338, 1
      %v2378 = vrot.slane %v2339, 1
      %v2379 = vsel %vm1456, %v2377, %v2378
      %v2380 = vrot.slane %v2340, 1
      %v2381 = vrot.slane %v2341, 1
      %v2382 = vsel %vm1456, %v2380, %v2381
      %v2383 = vrot.slane %v2342, 1
      %v2384 = vrot.slane %v2343, 1
      %v2385 = vsel %vm1456, %v2383, %v2384
      %v2386 = vrot.slane %v2344, 1
      %v2387 = vrot.slane %v2345, 1
      %v2388 = vsel %vm1456, %v2386, %v2387
      %v2389 = vrot.slane %v2346, 1
      %v2390 = vrot.slane %v2347, 1
      %v2391 = vsel %vm1456, %v2389, %v2390
      %v2392 = vrot.slane %v2348, 1
      %v2393 = vrot.slane %v2349, 1
      %v2394 = vsel %vm1456, %v2392, %v2393
      %v2395 = vrot.slane %v2350, 1
      %v2396 = vrot.slane %v2351, 1
      %v2397 = vsel %vm1456, %v2395, %v2396
      %v2398 = vrot.slane %v2352, 1
      %v2399 = vrot.slane %v2353, 1
      %v2400 = vsel %vm1456, %v2398, %v2399
      %v2401 = vrot.slane %v2354, 1
      %v2402 = vrot.slane %v2355, 1
      %v2403 = vsel %vm1456, %v2401, %v2402
      %2404 = vrot.lane.b32.xlu0 %v2358, 20
      %v2405 = vpop.permute.xlu0 %2404
      %2406 = vrot.lane.b32.xlu0 %v2361, 20
      %v2407 = vpop.permute.xlu0 %2406
      %2408 = vrot.lane.b32.xlu0 %v2364, 20
      %v2409 = vpop.permute.xlu0 %2408
      %2410 = vrot.lane.b32.xlu0 %v2367, 20
      %v2411 = vpop.permute.xlu0 %2410
      %2412 = vrot.lane.b32.xlu0 %v2370, 20
      %v2413 = vpop.permute.xlu0 %2412
      %2414 = vrot.lane.b32.xlu0 %v2373, 20
      %v2415 = vpop.permute.xlu0 %2414
      %2416 = vrot.lane.b32.xlu0 %v2376, 20
      %v2417 = vpop.permute.xlu0 %2416
      %2418 = vrot.lane.b32.xlu0 %v2379, 20
      %v2419 = vpop.permute.xlu0 %2418
      %2420 = vrot.lane.b32.xlu0 %v2382, 20
      %v2421 = vpop.permute.xlu0 %2420
      %2422 = vrot.lane.b32.xlu0 %v2385, 20
      %v2423 = vpop.permute.xlu0 %2422
      %2424 = vrot.lane.b32.xlu0 %v2388, 20
      %v2425 = vpop.permute.xlu0 %2424
      %2426 = vrot.lane.b32.xlu0 %v2391, 20
      %v2427 = vpop.permute.xlu0 %2426
      %2428 = vrot.lane.b32.xlu0 %v2394, 20
      %v2429 = vpop.permute.xlu0 %2428
      %2430 = vrot.lane.b32.xlu0 %v2397, 20
      %v2431 = vpop.permute.xlu0 %2430
      %2432 = vrot.lane.b32.xlu0 %v2400, 20
      %v2433 = vpop.permute.xlu0 %2432
      %2434 = vrot.lane.b32.xlu0 %v2403, 20
      %v2435 = vpop.permute.xlu0 %2434
      %vm2452 = vcmask 195744
      %2453 = vst.msk [vmem:[#allocation3] sm:$0xff] %vm2452, %v2405
      %2454 = vst.msk [vmem:[#allocation3 + $0x8] sm:$0xff] %vm2452, %v2407
      %2455 = vst.msk [vmem:[#allocation3 + $0x10] sm:$0xff] %vm2452, %v2409
      %2456 = vst.msk [vmem:[#allocation3 + $0x18] sm:$0xff] %vm2452, %v2411
      %2457 = vst.msk [vmem:[#allocation3 + $0x20] sm:$0xff] %vm2452, %v2413
      %2458 = vst.msk [vmem:[#allocation3 + $0x28] sm:$0xff] %vm2452, %v2415
      %2459 = vst.msk [vmem:[#allocation3 + $0x30] sm:$0xff] %vm2452, %v2417
      %2460 = vst.msk [vmem:[#allocation3 + $0x38] sm:$0xff] %vm2452, %v2419
      %2461 = vst.msk [vmem:[#allocation3 + $0x40] sm:$0xff] %vm2452, %v2421
      %2462 = vst.msk [vmem:[#allocation3 + $0x48] sm:$0xff] %vm2452, %v2423
      %2463 = vst.msk [vmem:[#allocation3 + $0x50] sm:$0xff] %vm2452, %v2425
      %2464 = vst.msk [vmem:[#allocation3 + $0x58] sm:$0xff] %vm2452, %v2427
      %2465 = vst.msk [vmem:[#allocation3 + $0x60] sm:$0xff] %vm2452, %v2429
      %2466 = vst.msk [vmem:[#allocation3 + $0x68] sm:$0xff] %vm2452, %v2431
      %2467 = vst.msk [vmem:[#allocation3 + $0x70] sm:$0xff] %vm2452, %v2433
      %2468 = vst.msk [vmem:[#allocation3 + $0x78] sm:$0xff] %vm2452, %v2435
      %s2469 = scalar_lea.vmem [#allocation2], 24
      %v2470 = vld [vmem:[%s2469] sm:$0xf]
      %v2471 = vld [vmem:[%s2469 + $0x4] sm:$0xf]
      %v2472 = vld [vmem:[%s2469 + $0xc] sm:$0xf]
      %v2473 = vld [vmem:[%s2469 + $0x10] sm:$0xf]
      %v2474 = vld [vmem:[%s2469 + $0x18] sm:$0xf]
      %v2475 = vld [vmem:[%s2469 + $0x1c] sm:$0xf]
      %v2476 = vld [vmem:[%s2469 + $0x24] sm:$0xf]
      %v2477 = vld [vmem:[%s2469 + $0x28] sm:$0xf]
      %v2478 = vld [vmem:[%s2469 + $0x30] sm:$0xf]
      %v2479 = vld [vmem:[%s2469 + $0x34] sm:$0xf]
      %v2480 = vld [vmem:[%s2469 + $0x3c] sm:$0xf]
      %v2481 = vld [vmem:[%s2469 + $0x40] sm:$0xf]
      %v2482 = vld [vmem:[%s2469 + $0x48] sm:$0xf]
      %v2483 = vld [vmem:[%s2469 + $0x4c] sm:$0xf]
      %v2484 = vld [vmem:[%s2469 + $0x54] sm:$0xf]
      %v2485 = vld [vmem:[%s2469 + $0x58] sm:$0xf]
      %v2486 = vld [vmem:[%s2469 + $0x60] sm:$0xf]
      %v2487 = vld [vmem:[%s2469 + $0x64] sm:$0xf]
      %v2488 = vld [vmem:[%s2469 + $0x6c] sm:$0xf]
      %v2489 = vld [vmem:[%s2469 + $0x70] sm:$0xf]
      %v2490 = vld [vmem:[%s2469 + $0x78] sm:$0xf]
      %v2491 = vld [vmem:[%s2469 + $0x7c] sm:$0xf]
      %v2492 = vld [vmem:[%s2469 + $0x84] sm:$0xf]
      %v2493 = vld [vmem:[%s2469 + $0x88] sm:$0xf]
      %v2494 = vld [vmem:[%s2469 + $0x90] sm:$0xf]
      %v2495 = vld [vmem:[%s2469 + $0x94] sm:$0xf]
      %v2496 = vld [vmem:[%s2469 + $0x9c] sm:$0xf]
      %v2497 = vld [vmem:[%s2469 + $0xa0] sm:$0xf]
      %v2498 = vld [vmem:[%s2469 + $0xa8] sm:$0xf]
      %v2499 = vld [vmem:[%s2469 + $0xac] sm:$0xf]
      %v2500 = vld [vmem:[%s2469 + $0xb4] sm:$0xf]
      %v2501 = vld [vmem:[%s2469 + $0xb8] sm:$0xf]
      %v2534 = vunpack.c.l.b16 %v2470
      %v2535 = vunpack.c.l.b16 %v2471
      %v2536 = vunpack.c.l.b16 %v2472
      %v2537 = vunpack.c.l.b16 %v2473
      %v2538 = vunpack.c.l.b16 %v2474
      %v2539 = vunpack.c.l.b16 %v2475
      %v2540 = vunpack.c.l.b16 %v2476
      %v2541 = vunpack.c.l.b16 %v2477
      %v2542 = vunpack.c.l.b16 %v2478
      %v2543 = vunpack.c.l.b16 %v2479
      %v2544 = vunpack.c.l.b16 %v2480
      %v2545 = vunpack.c.l.b16 %v2481
      %v2546 = vunpack.c.l.b16 %v2482
      %v2547 = vunpack.c.l.b16 %v2483
      %v2548 = vunpack.c.l.b16 %v2484
      %v2549 = vunpack.c.l.b16 %v2485
      %v2550 = vunpack.c.l.b16 %v2486
      %v2551 = vunpack.c.l.b16 %v2487
      %v2552 = vunpack.c.l.b16 %v2488
      %v2553 = vunpack.c.l.b16 %v2489
      %v2554 = vunpack.c.l.b16 %v2490
      %v2555 = vunpack.c.l.b16 %v2491
      %v2556 = vunpack.c.l.b16 %v2492
      %v2557 = vunpack.c.l.b16 %v2493
      %v2558 = vunpack.c.l.b16 %v2494
      %v2559 = vunpack.c.l.b16 %v2495
      %v2560 = vunpack.c.l.b16 %v2496
      %v2561 = vunpack.c.l.b16 %v2497
      %v2562 = vunpack.c.l.b16 %v2498
      %v2563 = vunpack.c.l.b16 %v2499
      %v2564 = vunpack.c.l.b16 %v2500
      %v2565 = vunpack.c.l.b16 %v2501
      %v2566 = vpack.c.b16 %v2535, %v2534
      %v2567 = vpack.c.b16 %v2537, %v2536
      %v2568 = vpack.c.b16 %v2539, %v2538
      %v2569 = vpack.c.b16 %v2541, %v2540
      %v2570 = vpack.c.b16 %v2543, %v2542
      %v2571 = vpack.c.b16 %v2545, %v2544
      %v2572 = vpack.c.b16 %v2547, %v2546
      %v2573 = vpack.c.b16 %v2549, %v2548
      %v2574 = vpack.c.b16 %v2551, %v2550
      %v2575 = vpack.c.b16 %v2553, %v2552
      %v2576 = vpack.c.b16 %v2555, %v2554
      %v2577 = vpack.c.b16 %v2557, %v2556
      %v2578 = vpack.c.b16 %v2559, %v2558
      %v2579 = vpack.c.b16 %v2561, %v2560
      %v2580 = vpack.c.b16 %v2563, %v2562
      %v2581 = vpack.c.b16 %v2565, %v2564
      %2582 = vrot.lane.b32.xlu0 %v2566, 24
      %v2583 = vpop.permute.xlu0 %2582
      %2584 = vrot.lane.b32.xlu0 %v2567, 24
      %v2585 = vpop.permute.xlu0 %2584
      %2586 = vrot.lane.b32.xlu0 %v2568, 24
      %v2587 = vpop.permute.xlu0 %2586
      %2588 = vrot.lane.b32.xlu0 %v2569, 24
      %v2589 = vpop.permute.xlu0 %2588
      %2590 = vrot.lane.b32.xlu0 %v2570, 24
      %v2591 = vpop.permute.xlu0 %2590
      %2592 = vrot.lane.b32.xlu0 %v2571, 24
      %v2593 = vpop.permute.xlu0 %2592
      %2594 = vrot.lane.b32.xlu0 %v2572, 24
      %v2595 = vpop.permute.xlu0 %2594
      %2596 = vrot.lane.b32.xlu0 %v2573, 24
      %v2597 = vpop.permute.xlu0 %2596
      %2598 = vrot.lane.b32.xlu0 %v2574, 24
      %v2599 = vpop.permute.xlu0 %2598
      %2600 = vrot.lane.b32.xlu0 %v2575, 24
      %v2601 = vpop.permute.xlu0 %2600
      %2602 = vrot.lane.b32.xlu0 %v2576, 24
      %v2603 = vpop.permute.xlu0 %2602
      %2604 = vrot.lane.b32.xlu0 %v2577, 24
      %v2605 = vpop.permute.xlu0 %2604
      %2606 = vrot.lane.b32.xlu0 %v2578, 24
      %v2607 = vpop.permute.xlu0 %2606
      %2608 = vrot.lane.b32.xlu0 %v2579, 24
      %v2609 = vpop.permute.xlu0 %2608
      %2610 = vrot.lane.b32.xlu0 %v2580, 24
      %v2611 = vpop.permute.xlu0 %2610
      %2612 = vrot.lane.b32.xlu0 %v2581, 24
      %v2613 = vpop.permute.xlu0 %2612
      %vm2630 = vcmask 228544
      %2631 = vst.msk [vmem:[#allocation3] sm:$0xff] %vm2630, %v2583
      %2632 = vst.msk [vmem:[#allocation3 + $0x8] sm:$0xff] %vm2630, %v2585
      %2633 = vst.msk [vmem:[#allocation3 + $0x10] sm:$0xff] %vm2630, %v2587
      %2634 = vst.msk [vmem:[#allocation3 + $0x18] sm:$0xff] %vm2630, %v2589
      %2635 = vst.msk [vmem:[#allocation3 + $0x20] sm:$0xff] %vm2630, %v2591
      %2636 = vst.msk [vmem:[#allocation3 + $0x28] sm:$0xff] %vm2630, %v2593
      %2637 = vst.msk [vmem:[#allocation3 + $0x30] sm:$0xff] %vm2630, %v2595
      %2638 = vst.msk [vmem:[#allocation3 + $0x38] sm:$0xff] %vm2630, %v2597
      %2639 = vst.msk [vmem:[#allocation3 + $0x40] sm:$0xff] %vm2630, %v2599
      %2640 = vst.msk [vmem:[#allocation3 + $0x48] sm:$0xff] %vm2630, %v2601
      %2641 = vst.msk [vmem:[#allocation3 + $0x50] sm:$0xff] %vm2630, %v2603
      %2642 = vst.msk [vmem:[#allocation3 + $0x58] sm:$0xff] %vm2630, %v2605
      %2643 = vst.msk [vmem:[#allocation3 + $0x60] sm:$0xff] %vm2630, %v2607
      %2644 = vst.msk [vmem:[#allocation3 + $0x68] sm:$0xff] %vm2630, %v2609
      %2645 = vst.msk [vmem:[#allocation3 + $0x70] sm:$0xff] %vm2630, %v2611
      %2646 = vst.msk [vmem:[#allocation3 + $0x78] sm:$0xff] %vm2630, %v2613
      %v2647 = vld [vmem:[%s2469] sm:$0xf]
      %v2648 = vld [vmem:[%s2469 + $0x4] sm:$0xf]
      %v2649 = vld [vmem:[%s2469 + $0x8] sm:$0x1]
      %v2650 = vld [vmem:[%s2469 + $0xc] sm:$0xf]
      %v2651 = vld [vmem:[%s2469 + $0x10] sm:$0xf]
      %v2652 = vld [vmem:[%s2469 + $0x14] sm:$0x1]
      %v2653 = vld [vmem:[%s2469 + $0x18] sm:$0xf]
      %v2654 = vld [vmem:[%s2469 + $0x1c] sm:$0xf]
      %v2655 = vld [vmem:[%s2469 + $0x20] sm:$0x1]
      %v2656 = vld [vmem:[%s2469 + $0x24] sm:$0xf]
      %v2657 = vld [vmem:[%s2469 + $0x28] sm:$0xf]
      %v2658 = vld [vmem:[%s2469 + $0x2c] sm:$0x1]
      %v2659 = vld [vmem:[%s2469 + $0x30] sm:$0xf]
      %v2660 = vld [vmem:[%s2469 + $0x34] sm:$0xf]
      %v2661 = vld [vmem:[%s2469 + $0x38] sm:$0x1]
      %v2662 = vld [vmem:[%s2469 + $0x3c] sm:$0xf]
      %v2663 = vld [vmem:[%s2469 + $0x40] sm:$0xf]
      %v2664 = vld [vmem:[%s2469 + $0x44] sm:$0x1]
      %v2665 = vld [vmem:[%s2469 + $0x48] sm:$0xf]
      %v2666 = vld [vmem:[%s2469 + $0x4c] sm:$0xf]
      %v2667 = vld [vmem:[%s2469 + $0x50] sm:$0x1]
      %v2668 = vld [vmem:[%s2469 + $0x54] sm:$0xf]
      %v2669 = vld [vmem:[%s2469 + $0x58] sm:$0xf]
      %v2670 = vld [vmem:[%s2469 + $0x5c] sm:$0x1]
      %v2671 = vld [vmem:[%s2469 + $0x60] sm:$0xf]
      %v2672 = vld [vmem:[%s2469 + $0x64] sm:$0xf]
      %v2673 = vld [vmem:[%s2469 + $0x68] sm:$0x1]
      %v2674 = vld [vmem:[%s2469 + $0x6c] sm:$0xf]
      %v2675 = vld [vmem:[%s2469 + $0x70] sm:$0xf]
      %v2676 = vld [vmem:[%s2469 + $0x74] sm:$0x1]
      %v2677 = vld [vmem:[%s2469 + $0x78] sm:$0xf]
      %v2678 = vld [vmem:[%s2469 + $0x7c] sm:$0xf]
      %v2679 = vld [vmem:[%s2469 + $0x80] sm:$0x1]
      %v2680 = vld [vmem:[%s2469 + $0x84] sm:$0xf]
      %v2681 = vld [vmem:[%s2469 + $0x88] sm:$0xf]
      %v2682 = vld [vmem:[%s2469 + $0x8c] sm:$0x1]
      %v2683 = vld [vmem:[%s2469 + $0x90] sm:$0xf]
      %v2684 = vld [vmem:[%s2469 + $0x94] sm:$0xf]
      %v2685 = vld [vmem:[%s2469 + $0x98] sm:$0x1]
      %v2686 = vld [vmem:[%s2469 + $0x9c] sm:$0xf]
      %v2687 = vld [vmem:[%s2469 + $0xa0] sm:$0xf]
      %v2688 = vld [vmem:[%s2469 + $0xa4] sm:$0x1]
      %v2689 = vld [vmem:[%s2469 + $0xa8] sm:$0xf]
      %v2690 = vld [vmem:[%s2469 + $0xac] sm:$0xf]
      %v2691 = vld [vmem:[%s2469 + $0xb0] sm:$0x1]
      %v2692 = vld [vmem:[%s2469 + $0xb4] sm:$0xf]
      %v2693 = vld [vmem:[%s2469 + $0xb8] sm:$0xf]
      %v2694 = vld [vmem:[%s2469 + $0xbc] sm:$0x1]
      %v2743 = vunpack.c.l.b16 %v2647
      %v2744 = vunpack.c.l.b16 %v2648
      %v2745 = vunpack.c.l.b16 %v2649
      %v2746 = vunpack.c.l.b16 %v2650
      %v2747 = vunpack.c.l.b16 %v2651
      %v2748 = vunpack.c.l.b16 %v2652
      %v2749 = vunpack.c.l.b16 %v2653
      %v2750 = vunpack.c.l.b16 %v2654
      %v2751 = vunpack.c.l.b16 %v2655
      %v2752 = vunpack.c.l.b16 %v2656
      %v2753 = vunpack.c.l.b16 %v2657
      %v2754 = vunpack.c.l.b16 %v2658
      %v2755 = vunpack.c.l.b16 %v2659
      %v2756 = vunpack.c.l.b16 %v2660
      %v2757 = vunpack.c.l.b16 %v2661
      %v2758 = vunpack.c.l.b16 %v2662
      %v2759 = vunpack.c.l.b16 %v2663
      %v2760 = vunpack.c.l.b16 %v2664
      %v2761 = vunpack.c.l.b16 %v2665
      %v2762 = vunpack.c.l.b16 %v2666
      %v2763 = vunpack.c.l.b16 %v2667
      %v2764 = vunpack.c.l.b16 %v2668
      %v2765 = vunpack.c.l.b16 %v2669
      %v2766 = vunpack.c.l.b16 %v2670
      %v2767 = vunpack.c.l.b16 %v2671
      %v2768 = vunpack.c.l.b16 %v2672
      %v2769 = vunpack.c.l.b16 %v2673
      %v2770 = vunpack.c.l.b16 %v2674
      %v2771 = vunpack.c.l.b16 %v2675
      %v2772 = vunpack.c.l.b16 %v2676
      %v2773 = vunpack.c.l.b16 %v2677
      %v2774 = vunpack.c.l.b16 %v2678
      %v2775 = vunpack.c.l.b16 %v2679
      %v2776 = vunpack.c.l.b16 %v2680
      %v2777 = vunpack.c.l.b16 %v2681
      %v2778 = vunpack.c.l.b16 %v2682
      %v2779 = vunpack.c.l.b16 %v2683
      %v2780 = vunpack.c.l.b16 %v2684
      %v2781 = vunpack.c.l.b16 %v2685
      %v2782 = vunpack.c.l.b16 %v2686
      %v2783 = vunpack.c.l.b16 %v2687
      %v2784 = vunpack.c.l.b16 %v2688
      %v2785 = vunpack.c.l.b16 %v2689
      %v2786 = vunpack.c.l.b16 %v2690
      %v2787 = vunpack.c.l.b16 %v2691
      %v2788 = vunpack.c.l.b16 %v2692
      %v2789 = vunpack.c.l.b16 %v2693
      %v2790 = vunpack.c.l.b16 %v2694
      %v2791 = vpack.c.b16 %v2744, %v2743
      %v2792 = vpack.c.b16 %v2745, %v2745
      %v2793 = vpack.c.b16 %v2747, %v2746
      %v2794 = vpack.c.b16 %v2748, %v2748
      %v2795 = vpack.c.b16 %v2750, %v2749
      %v2796 = vpack.c.b16 %v2751, %v2751
      %v2797 = vpack.c.b16 %v2753, %v2752
      %v2798 = vpack.c.b16 %v2754, %v2754
      %v2799 = vpack.c.b16 %v2756, %v2755
      %v2800 = vpack.c.b16 %v2757, %v2757
      %v2801 = vpack.c.b16 %v2759, %v2758
      %v2802 = vpack.c.b16 %v2760, %v2760
      %v2803 = vpack.c.b16 %v2762, %v2761
      %v2804 = vpack.c.b16 %v2763, %v2763
      %v2805 = vpack.c.b16 %v2765, %v2764
      %v2806 = vpack.c.b16 %v2766, %v2766
      %v2807 = vpack.c.b16 %v2768, %v2767
      %v2808 = vpack.c.b16 %v2769, %v2769
      %v2809 = vpack.c.b16 %v2771, %v2770
      %v2810 = vpack.c.b16 %v2772, %v2772
      %v2811 = vpack.c.b16 %v2774, %v2773
      %v2812 = vpack.c.b16 %v2775, %v2775
      %v2813 = vpack.c.b16 %v2777, %v2776
      %v2814 = vpack.c.b16 %v2778, %v2778
      %v2815 = vpack.c.b16 %v2780, %v2779
      %v2816 = vpack.c.b16 %v2781, %v2781
      %v2817 = vpack.c.b16 %v2783, %v2782
      %v2818 = vpack.c.b16 %v2784, %v2784
      %v2819 = vpack.c.b16 %v2786, %v2785
      %v2820 = vpack.c.b16 %v2787, %v2787
      %v2821 = vpack.c.b16 %v2789, %v2788
      %v2822 = vpack.c.b16 %v2790, %v2790
      %v2824 = vshrl.u32 %v2791, 16
      %v2826 = vshll.u32 %v2791, 16
      %v2828 = vrot.slane %v2826, 1
      %v2829 = vor.u32 %v2824, %v2828
      %v2831 = vshll.u32 %v2792, 16
      %v2833 = vrot.slane %v2831, 1
      %v2834 = vsel %vm1022, %v2829, %v2833
      %v2836 = vshrl.u32 %v2793, 16
      %v2838 = vshll.u32 %v2793, 16
      %v2840 = vrot.slane %v2838, 1
      %v2841 = vor.u32 %v2836, %v2840
      %v2843 = vshll.u32 %v2794, 16
      %v2845 = vrot.slane %v2843, 1
      %v2846 = vsel %vm1022, %v2841, %v2845
      %v2848 = vshrl.u32 %v2795, 16
      %v2850 = vshll.u32 %v2795, 16
      %v2852 = vrot.slane %v2850, 1
      %v2853 = vor.u32 %v2848, %v2852
      %v2855 = vshll.u32 %v2796, 16
      %v2857 = vrot.slane %v2855, 1
      %v2858 = vsel %vm1022, %v2853, %v2857
      %v2860 = vshrl.u32 %v2797, 16
      %v2862 = vshll.u32 %v2797, 16
      %v2864 = vrot.slane %v2862, 1
      %v2865 = vor.u32 %v2860, %v2864
      %v2867 = vshll.u32 %v2798, 16
      %v2869 = vrot.slane %v2867, 1
      %v2870 = vsel %vm1022, %v2865, %v2869
      %v2872 = vshrl.u32 %v2799, 16
      %v2874 = vshll.u32 %v2799, 16
      %v2876 = vrot.slane %v2874, 1
      %v2877 = vor.u32 %v2872, %v2876
      %v2879 = vshll.u32 %v2800, 16
      %v2881 = vrot.slane %v2879, 1
      %v2882 = vsel %vm1022, %v2877, %v2881
      %v2884 = vshrl.u32 %v2801, 16
      %v2886 = vshll.u32 %v2801, 16
      %v2888 = vrot.slane %v2886, 1
      %v2889 = vor.u32 %v2884, %v2888
      %v2891 = vshll.u32 %v2802, 16
      %v2893 = vrot.slane %v2891, 1
      %v2894 = vsel %vm1022, %v2889, %v2893
      %v2896 = vshrl.u32 %v2803, 16
      %v2898 = vshll.u32 %v2803, 16
      %v2900 = vrot.slane %v2898, 1
      %v2901 = vor.u32 %v2896, %v2900
      %v2903 = vshll.u32 %v2804, 16
      %v2905 = vrot.slane %v2903, 1
      %v2906 = vsel %vm1022, %v2901, %v2905
      %v2908 = vshrl.u32 %v2805, 16
      %v2910 = vshll.u32 %v2805, 16
      %v2912 = vrot.slane %v2910, 1
      %v2913 = vor.u32 %v2908, %v2912
      %v2915 = vshll.u32 %v2806, 16
      %v2917 = vrot.slane %v2915, 1
      %v2918 = vsel %vm1022, %v2913, %v2917
      %v2920 = vshrl.u32 %v2807, 16
      %v2922 = vshll.u32 %v2807, 16
      %v2924 = vrot.slane %v2922, 1
      %v2925 = vor.u32 %v2920, %v2924
      %v2927 = vshll.u32 %v2808, 16
      %v2929 = vrot.slane %v2927, 1
      %v2930 = vsel %vm1022, %v2925, %v2929
      %v2932 = vshrl.u32 %v2809, 16
      %v2934 = vshll.u32 %v2809, 16
      %v2936 = vrot.slane %v2934, 1
      %v2937 = vor.u32 %v2932, %v2936
      %v2939 = vshll.u32 %v2810, 16
      %v2941 = vrot.slane %v2939, 1
      %v2942 = vsel %vm1022, %v2937, %v2941
      %v2944 = vshrl.u32 %v2811, 16
      %v2946 = vshll.u32 %v2811, 16
      %v2948 = vrot.slane %v2946, 1
      %v2949 = vor.u32 %v2944, %v2948
      %v2951 = vshll.u32 %v2812, 16
      %v2953 = vrot.slane %v2951, 1
      %v2954 = vsel %vm1022, %v2949, %v2953
      %v2956 = vshrl.u32 %v2813, 16
      %v2958 = vshll.u32 %v2813, 16
      %v2960 = vrot.slane %v2958, 1
      %v2961 = vor.u32 %v2956, %v2960
      %v2963 = vshll.u32 %v2814, 16
      %v2965 = vrot.slane %v2963, 1
      %v2966 = vsel %vm1022, %v2961, %v2965
      %v2968 = vshrl.u32 %v2815, 16
      %v2970 = vshll.u32 %v2815, 16
      %v2972 = vrot.slane %v2970, 1
      %v2973 = vor.u32 %v2968, %v2972
      %v2975 = vshll.u32 %v2816, 16
      %v2977 = vrot.slane %v2975, 1
      %v2978 = vsel %vm1022, %v2973, %v2977
      %v2980 = vshrl.u32 %v2817, 16
      %v2982 = vshll.u32 %v2817, 16
      %v2984 = vrot.slane %v2982, 1
      %v2985 = vor.u32 %v2980, %v2984
      %v2987 = vshll.u32 %v2818, 16
      %v2989 = vrot.slane %v2987, 1
      %v2990 = vsel %vm1022, %v2985, %v2989
      %v2992 = vshrl.u32 %v2819, 16
      %v2994 = vshll.u32 %v2819, 16
      %v2996 = vrot.slane %v2994, 1
      %v2997 = vor.u32 %v2992, %v2996
      %v2999 = vshll.u32 %v2820, 16
      %v3001 = vrot.slane %v2999, 1
      %v3002 = vsel %vm1022, %v2997, %v3001
      %v3004 = vshrl.u32 %v2821, 16
      %v3006 = vshll.u32 %v2821, 16
      %v3008 = vrot.slane %v3006, 1
      %v3009 = vor.u32 %v3004, %v3008
      %v3011 = vshll.u32 %v2822, 16
      %v3013 = vrot.slane %v3011, 1
      %v3014 = vsel %vm1022, %v3009, %v3013
      %3015 = vrot.lane.b32.xlu0 %v2834, 28
      %v3016 = vpop.permute.xlu0 %3015
      %3017 = vrot.lane.b32.xlu0 %v2846, 28
      %v3018 = vpop.permute.xlu0 %3017
      %3019 = vrot.lane.b32.xlu0 %v2858, 28
      %v3020 = vpop.permute.xlu0 %3019
      %3021 = vrot.lane.b32.xlu0 %v2870, 28
      %v3022 = vpop.permute.xlu0 %3021
      %3023 = vrot.lane.b32.xlu0 %v2882, 28
      %v3024 = vpop.permute.xlu0 %3023
      %3025 = vrot.lane.b32.xlu0 %v2894, 28
      %v3026 = vpop.permute.xlu0 %3025
      %3027 = vrot.lane.b32.xlu0 %v2906, 28
      %v3028 = vpop.permute.xlu0 %3027
      %3029 = vrot.lane.b32.xlu0 %v2918, 28
      %v3030 = vpop.permute.xlu0 %3029
      %3031 = vrot.lane.b32.xlu0 %v2930, 28
      %v3032 = vpop.permute.xlu0 %3031
      %3033 = vrot.lane.b32.xlu0 %v2942, 28
      %v3034 = vpop.permute.xlu0 %3033
      %3035 = vrot.lane.b32.xlu0 %v2954, 28
      %v3036 = vpop.permute.xlu0 %3035
      %3037 = vrot.lane.b32.xlu0 %v2966, 28
      %v3038 = vpop.permute.xlu0 %3037
      %3039 = vrot.lane.b32.xlu0 %v2978, 28
      %v3040 = vpop.permute.xlu0 %3039
      %3041 = vrot.lane.b32.xlu0 %v2990, 28
      %v3042 = vpop.permute.xlu0 %3041
      %3043 = vrot.lane.b32.xlu0 %v3002, 28
      %v3044 = vpop.permute.xlu0 %3043
      %3045 = vrot.lane.b32.xlu0 %v3014, 28
      %v3046 = vpop.permute.xlu0 %3045
      %vm3063 = vcmask 261344
      %3064 = vst.msk [vmem:[#allocation3] sm:$0xff] %vm3063, %v3016
      %3065 = vst.msk [vmem:[#allocation3 + $0x8] sm:$0xff] %vm3063, %v3018
      %3066 = vst.msk [vmem:[#allocation3 + $0x10] sm:$0xff] %vm3063, %v3020
      %3067 = vst.msk [vmem:[#allocation3 + $0x18] sm:$0xff] %vm3063, %v3022
      %3068 = vst.msk [vmem:[#allocation3 + $0x20] sm:$0xff] %vm3063, %v3024
      %3069 = vst.msk [vmem:[#allocation3 + $0x28] sm:$0xff] %vm3063, %v3026
      %3070 = vst.msk [vmem:[#allocation3 + $0x30] sm:$0xff] %vm3063, %v3028
      %3071 = vst.msk [vmem:[#allocation3 + $0x38] sm:$0xff] %vm3063, %v3030
      %3072 = vst.msk [vmem:[#allocation3 + $0x40] sm:$0xff] %vm3063, %v3032
      %3073 = vst.msk [vmem:[#allocation3 + $0x48] sm:$0xff] %vm3063, %v3034
      %3074 = vst.msk [vmem:[#allocation3 + $0x50] sm:$0xff] %vm3063, %v3036
      %3075 = vst.msk [vmem:[#allocation3 + $0x58] sm:$0xff] %vm3063, %v3038
      %3076 = vst.msk [vmem:[#allocation3 + $0x60] sm:$0xff] %vm3063, %v3040
      %3077 = vst.msk [vmem:[#allocation3 + $0x68] sm:$0xff] %vm3063, %v3042
      %3078 = vst.msk [vmem:[#allocation3 + $0x70] sm:$0xff] %vm3063, %v3044
      %3079 = vst.msk [vmem:[#allocation3 + $0x78] sm:$0xff] %vm3063, %v3046
      %v3080 = vld [vmem:[%s2469] sm:$0xe]
      %v3081 = vld [vmem:[%s2469 + $0x4] sm:$0xf]
      %v3082 = vld [vmem:[%s2469 + $0x8] sm:$0x1]
      %v3083 = vld [vmem:[%s2469 + $0xc] sm:$0xe]
      %v3084 = vld [vmem:[%s2469 + $0x10] sm:$0xf]
      %v3085 = vld [vmem:[%s2469 + $0x14] sm:$0x1]
      %v3086 = vld [vmem:[%s2469 + $0x18] sm:$0xe]
      %v3087 = vld [vmem:[%s2469 + $0x1c] sm:$0xf]
      %v3088 = vld [vmem:[%s2469 + $0x20] sm:$0x1]
      %v3089 = vld [vmem:[%s2469 + $0x24] sm:$0xe]
      %v3090 = vld [vmem:[%s2469 + $0x28] sm:$0xf]
      %v3091 = vld [vmem:[%s2469 + $0x2c] sm:$0x1]
      %v3092 = vld [vmem:[%s2469 + $0x30] sm:$0xe]
      %v3093 = vld [vmem:[%s2469 + $0x34] sm:$0xf]
      %v3094 = vld [vmem:[%s2469 + $0x38] sm:$0x1]
      %v3095 = vld [vmem:[%s2469 + $0x3c] sm:$0xe]
      %v3096 = vld [vmem:[%s2469 + $0x40] sm:$0xf]
      %v3097 = vld [vmem:[%s2469 + $0x44] sm:$0x1]
      %v3098 = vld [vmem:[%s2469 + $0x48] sm:$0xe]
      %v3099 = vld [vmem:[%s2469 + $0x4c] sm:$0xf]
      %v3100 = vld [vmem:[%s2469 + $0x50] sm:$0x1]
      %v3101 = vld [vmem:[%s2469 + $0x54] sm:$0xe]
      %v3102 = vld [vmem:[%s2469 + $0x58] sm:$0xf]
      %v3103 = vld [vmem:[%s2469 + $0x5c] sm:$0x1]
      %v3104 = vld [vmem:[%s2469 + $0x60] sm:$0xe]
      %v3105 = vld [vmem:[%s2469 + $0x64] sm:$0xf]
      %v3106 = vld [vmem:[%s2469 + $0x68] sm:$0x1]
      %v3107 = vld [vmem:[%s2469 + $0x6c] sm:$0xe]
      %v3108 = vld [vmem:[%s2469 + $0x70] sm:$0xf]
      %v3109 = vld [vmem:[%s2469 + $0x74] sm:$0x1]
      %v3110 = vld [vmem:[%s2469 + $0x78] sm:$0xe]
      %v3111 = vld [vmem:[%s2469 + $0x7c] sm:$0xf]
      %v3112 = vld [vmem:[%s2469 + $0x80] sm:$0x1]
      %v3113 = vld [vmem:[%s2469 + $0x84] sm:$0xe]
      %v3114 = vld [vmem:[%s2469 + $0x88] sm:$0xf]
      %v3115 = vld [vmem:[%s2469 + $0x8c] sm:$0x1]
      %v3116 = vld [vmem:[%s2469 + $0x90] sm:$0xe]
      %v3117 = vld [vmem:[%s2469 + $0x94] sm:$0xf]
      %v3118 = vld [vmem:[%s2469 + $0x98] sm:$0x1]
      %v3119 = vld [vmem:[%s2469 + $0x9c] sm:$0xe]
      %v3120 = vld [vmem:[%s2469 + $0xa0] sm:$0xf]
      %v3121 = vld [vmem:[%s2469 + $0xa4] sm:$0x1]
      %v3122 = vld [vmem:[%s2469 + $0xa8] sm:$0xe]
      %v3123 = vld [vmem:[%s2469 + $0xac] sm:$0xf]
      %v3124 = vld [vmem:[%s2469 + $0xb0] sm:$0x1]
      %v3125 = vld [vmem:[%s2469 + $0xb4] sm:$0xe]
      %v3126 = vld [vmem:[%s2469 + $0xb8] sm:$0xf]
      %v3127 = vld [vmem:[%s2469 + $0xbc] sm:$0x1]
      %v3176 = vunpack.c.l.b16 %v3080
      %v3177 = vunpack.c.l.b16 %v3081
      %v3178 = vunpack.c.l.b16 %v3082
      %v3179 = vunpack.c.l.b16 %v3083
      %v3180 = vunpack.c.l.b16 %v3084
      %v3181 = vunpack.c.l.b16 %v3085
      %v3182 = vunpack.c.l.b16 %v3086
      %v3183 = vunpack.c.l.b16 %v3087
      %v3184 = vunpack.c.l.b16 %v3088
      %v3185 = vunpack.c.l.b16 %v3089
      %v3186 = vunpack.c.l.b16 %v3090
      %v3187 = vunpack.c.l.b16 %v3091
      %v3188 = vunpack.c.l.b16 %v3092
      %v3189 = vunpack.c.l.b16 %v3093
      %v3190 = vunpack.c.l.b16 %v3094
      %v3191 = vunpack.c.l.b16 %v3095
      %v3192 = vunpack.c.l.b16 %v3096
      %v3193 = vunpack.c.l.b16 %v3097
      %v3194 = vunpack.c.l.b16 %v3098
      %v3195 = vunpack.c.l.b16 %v3099
      %v3196 = vunpack.c.l.b16 %v3100
      %v3197 = vunpack.c.l.b16 %v3101
      %v3198 = vunpack.c.l.b16 %v3102
      %v3199 = vunpack.c.l.b16 %v3103
      %v3200 = vunpack.c.l.b16 %v3104
      %v3201 = vunpack.c.l.b16 %v3105
      %v3202 = vunpack.c.l.b16 %v3106
      %v3203 = vunpack.c.l.b16 %v3107
      %v3204 = vunpack.c.l.b16 %v3108
      %v3205 = vunpack.c.l.b16 %v3109
      %v3206 = vunpack.c.l.b16 %v3110
      %v3207 = vunpack.c.l.b16 %v3111
      %v3208 = vunpack.c.l.b16 %v3112
      %v3209 = vunpack.c.l.b16 %v3113
      %v3210 = vunpack.c.l.b16 %v3114
      %v3211 = vunpack.c.l.b16 %v3115
      %v3212 = vunpack.c.l.b16 %v3116
      %v3213 = vunpack.c.l.b16 %v3117
      %v3214 = vunpack.c.l.b16 %v3118
      %v3215 = vunpack.c.l.b16 %v3119
      %v3216 = vunpack.c.l.b16 %v3120
      %v3217 = vunpack.c.l.b16 %v3121
      %v3218 = vunpack.c.l.b16 %v3122
      %v3219 = vunpack.c.l.b16 %v3123
      %v3220 = vunpack.c.l.b16 %v3124
      %v3221 = vunpack.c.l.b16 %v3125
      %v3222 = vunpack.c.l.b16 %v3126
      %v3223 = vunpack.c.l.b16 %v3127
      %v3224 = vpack.c.b16 %v3177, %v3176
      %v3225 = vpack.c.b16 %v3178, %v3178
      %v3226 = vpack.c.b16 %v3180, %v3179
      %v3227 = vpack.c.b16 %v3181, %v3181
      %v3228 = vpack.c.b16 %v3183, %v3182
      %v3229 = vpack.c.b16 %v3184, %v3184
      %v3230 = vpack.c.b16 %v3186, %v3185
      %v3231 = vpack.c.b16 %v3187, %v3187
      %v3232 = vpack.c.b16 %v3189, %v3188
      %v3233 = vpack.c.b16 %v3190, %v3190
      %v3234 = vpack.c.b16 %v3192, %v3191
      %v3235 = vpack.c.b16 %v3193, %v3193
      %v3236 = vpack.c.b16 %v3195, %v3194
      %v3237 = vpack.c.b16 %v3196, %v3196
      %v3238 = vpack.c.b16 %v3198, %v3197
      %v3239 = vpack.c.b16 %v3199, %v3199
      %v3240 = vpack.c.b16 %v3201, %v3200
      %v3241 = vpack.c.b16 %v3202, %v3202
      %v3242 = vpack.c.b16 %v3204, %v3203
      %v3243 = vpack.c.b16 %v3205, %v3205
      %v3244 = vpack.c.b16 %v3207, %v3206
      %v3245 = vpack.c.b16 %v3208, %v3208
      %v3246 = vpack.c.b16 %v3210, %v3209
      %v3247 = vpack.c.b16 %v3211, %v3211
      %v3248 = vpack.c.b16 %v3213, %v3212
      %v3249 = vpack.c.b16 %v3214, %v3214
      %v3250 = vpack.c.b16 %v3216, %v3215
      %v3251 = vpack.c.b16 %v3217, %v3217
      %v3252 = vpack.c.b16 %v3219, %v3218
      %v3253 = vpack.c.b16 %v3220, %v3220
      %v3254 = vpack.c.b16 %v3222, %v3221
      %v3255 = vpack.c.b16 %v3223, %v3223
      %v3256 = vrot.slane %v3224, 1
      %v3257 = vrot.slane %v3225, 1
      %v3258 = vsel %vm1456, %v3256, %v3257
      %v3259 = vrot.slane %v3226, 1
      %v3260 = vrot.slane %v3227, 1
      %v3261 = vsel %vm1456, %v3259, %v3260
      %v3262 = vrot.slane %v3228, 1
      %v3263 = vrot.slane %v3229, 1
      %v3264 = vsel %vm1456, %v3262, %v3263
      %v3265 = vrot.slane %v3230, 1
      %v3266 = vrot.slane %v3231, 1
      %v3267 = vsel %vm1456, %v3265, %v3266
      %v3268 = vrot.slane %v3232, 1
      %v3269 = vrot.slane %v3233, 1
      %v3270 = vsel %vm1456, %v3268, %v3269
      %v3271 = vrot.slane %v3234, 1
      %v3272 = vrot.slane %v3235, 1
      %v3273 = vsel %vm1456, %v3271, %v3272
      %v3274 = vrot.slane %v3236, 1
      %v3275 = vrot.slane %v3237, 1
      %v3276 = vsel %vm1456, %v3274, %v3275
      %v3277 = vrot.slane %v3238, 1
      %v3278 = vrot.slane %v3239, 1
      %v3279 = vsel %vm1456, %v3277, %v3278
      %v3280 = vrot.slane %v3240, 1
      %v3281 = vrot.slane %v3241, 1
      %v3282 = vsel %vm1456, %v3280, %v3281
      %v3283 = vrot.slane %v3242, 1
      %v3284 = vrot.slane %v3243, 1
      %v3285 = vsel %vm1456, %v3283, %v3284
      %v3286 = vrot.slane %v3244, 1
      %v3287 = vrot.slane %v3245, 1
      %v3288 = vsel %vm1456, %v3286, %v3287
      %v3289 = vrot.slane %v3246, 1
      %v3290 = vrot.slane %v3247, 1
      %v3291 = vsel %vm1456, %v3289, %v3290
      %v3292 = vrot.slane %v3248, 1
      %v3293 = vrot.slane %v3249, 1
      %v3294 = vsel %vm1456, %v3292, %v3293
      %v3295 = vrot.slane %v3250, 1
      %v3296 = vrot.slane %v3251, 1
      %v3297 = vsel %vm1456, %v3295, %v3296
      %v3298 = vrot.slane %v3252, 1
      %v3299 = vrot.slane %v3253, 1
      %v3300 = vsel %vm1456, %v3298, %v3299
      %v3301 = vrot.slane %v3254, 1
      %v3302 = vrot.slane %v3255, 1
      %v3303 = vsel %vm1456, %v3301, %v3302
      %3304 = vrot.lane.b32.xlu0 %v3258, 32
      %v3305 = vpop.permute.xlu0 %3304
      %3306 = vrot.lane.b32.xlu0 %v3261, 32
      %v3307 = vpop.permute.xlu0 %3306
      %3308 = vrot.lane.b32.xlu0 %v3264, 32
      %v3309 = vpop.permute.xlu0 %3308
      %3310 = vrot.lane.b32.xlu0 %v3267, 32
      %v3311 = vpop.permute.xlu0 %3310
      %3312 = vrot.lane.b32.xlu0 %v3270, 32
      %v3313 = vpop.permute.xlu0 %3312
      %3314 = vrot.lane.b32.xlu0 %v3273, 32
      %v3315 = vpop.permute.xlu0 %3314
      %3316 = vrot.lane.b32.xlu0 %v3276, 32
      %v3317 = vpop.permute.xlu0 %3316
      %3318 = vrot.lane.b32.xlu0 %v3279, 32
      %v3319 = vpop.permute.xlu0 %3318
      %3320 = vrot.lane.b32.xlu0 %v3282, 32
      %v3321 = vpop.permute.xlu0 %3320
      %3322 = vrot.lane.b32.xlu0 %v3285, 32
      %v3323 = vpop.permute.xlu0 %3322
      %3324 = vrot.lane.b32.xlu0 %v3288, 32
      %v3325 = vpop.permute.xlu0 %3324
      %3326 = vrot.lane.b32.xlu0 %v3291, 32
      %v3327 = vpop.permute.xlu0 %3326
      %3328 = vrot.lane.b32.xlu0 %v3294, 32
      %v3329 = vpop.permute.xlu0 %3328
      %3330 = vrot.lane.b32.xlu0 %v3297, 32
      %v3331 = vpop.permute.xlu0 %3330
      %3332 = vrot.lane.b32.xlu0 %v3300, 32
      %v3333 = vpop.permute.xlu0 %3332
      %3334 = vrot.lane.b32.xlu0 %v3303, 32
      %v3335 = vpop.permute.xlu0 %3334
      %vm3352 = vcmask 294144
      %3353 = vst.msk [vmem:[#allocation3] sm:$0xff] %vm3352, %v3305
      %3354 = vst.msk [vmem:[#allocation3 + $0x8] sm:$0xff] %vm3352, %v3307
      %3355 = vst.msk [vmem:[#allocation3 + $0x10] sm:$0xff] %vm3352, %v3309
      %3356 = vst.msk [vmem:[#allocation3 + $0x18] sm:$0xff] %vm3352, %v3311
      %3357 = vst.msk [vmem:[#allocation3 + $0x20] sm:$0xff] %vm3352, %v3313
      %3358 = vst.msk [vmem:[#allocation3 + $0x28] sm:$0xff] %vm3352, %v3315
      %3359 = vst.msk [vmem:[#allocation3 + $0x30] sm:$0xff] %vm3352, %v3317
      %3360 = vst.msk [vmem:[#allocation3 + $0x38] sm:$0xff] %vm3352, %v3319
      %3361 = vst.msk [vmem:[#allocation3 + $0x40] sm:$0xff] %vm3352, %v3321
      %3362 = vst.msk [vmem:[#allocation3 + $0x48] sm:$0xff] %vm3352, %v3323
      %3363 = vst.msk [vmem:[#allocation3 + $0x50] sm:$0xff] %vm3352, %v3325
      %3364 = vst.msk [vmem:[#allocation3 + $0x58] sm:$0xff] %vm3352, %v3327
      %3365 = vst.msk [vmem:[#allocation3 + $0x60] sm:$0xff] %vm3352, %v3329
      %3366 = vst.msk [vmem:[#allocation3 + $0x68] sm:$0xff] %vm3352, %v3331
      %3367 = vst.msk [vmem:[#allocation3 + $0x70] sm:$0xff] %vm3352, %v3333
      %3368 = vst.msk [vmem:[#allocation3 + $0x78] sm:$0xff] %vm3352, %v3335
      %v3369 = vld [vmem:[#allocation3] sm:$0xff]
      %v3370 = vld [vmem:[#allocation3 + $0x8] sm:$0xff]
      %v3371 = vld [vmem:[#allocation3 + $0x10] sm:$0xff]
      %v3372 = vld [vmem:[#allocation3 + $0x18] sm:$0xff]
      %v3373 = vld [vmem:[#allocation3 + $0x20] sm:$0xff]
      %v3374 = vld [vmem:[#allocation3 + $0x28] sm:$0xff]
      %v3375 = vld [vmem:[#allocation3 + $0x30] sm:$0xff]
      %v3376 = vld [vmem:[#allocation3 + $0x38] sm:$0xff]
      %v3377 = vld [vmem:[#allocation3 + $0x40] sm:$0xff]
      %v3378 = vld [vmem:[#allocation3 + $0x48] sm:$0xff]
      %v3379 = vld [vmem:[#allocation3 + $0x50] sm:$0xff]
      %v3380 = vld [vmem:[#allocation3 + $0x58] sm:$0xff]
      %v3381 = vld [vmem:[#allocation3 + $0x60] sm:$0xff]
      %v3382 = vld [vmem:[#allocation3 + $0x68] sm:$0xff]
      %v3383 = vld [vmem:[#allocation3 + $0x70] sm:$0xff]
      %v3384 = vld [vmem:[#allocation3 + $0x78] sm:$0xff]
      %v3385 = vld [vmem:[%s1] sm:$0xf]
      %v3386 = vld [vmem:[%s2] sm:$0xff]
      %3388 = vset.pattern.permute.xlu0 0
      %3389 = vperm.xlu0 %3388, %v3386
      %v3390 = vpop.permute.xlu0 %3389
      %vm3392 = vcmask 293888
      %v3394 = vsel %vm3392, %v3385, 0
      %v3397 = vsel %vm3392, %v3369, 0
      %v3400 = vsel %vm3392, %v3370, 0
      %v3403 = vsel %vm3392, %v3371, 0
      %v3406 = vsel %vm3392, %v3372, 0
      %v3409 = vsel %vm3392, %v3373, 0
      %v3412 = vsel %vm3392, %v3374, 0
      %v3415 = vsel %vm3392, %v3375, 0
      %v3418 = vsel %vm3392, %v3376, 0
      %v3421 = vsel %vm3392, %v3377, 0
      %v3424 = vsel %vm3392, %v3378, 0
      %v3427 = vsel %vm3392, %v3379, 0
      %v3430 = vsel %vm3392, %v3380, 0
      %v3433 = vsel %vm3392, %v3381, 0
      %v3436 = vsel %vm3392, %v3382, 0
      %v3439 = vsel %vm3392, %v3383, 0
      %v3442 = vsel %vm3392, %v3384, 0
      %3444 = vmatprep.subr.bf16.mxu0 0
      %3445 = vmatpush1.bf16.xpose.msra.mxu0 %v3397
      %3446 = vmatprep.subr.bf16.mxu0 0
      %3447 = vmatpush1.bf16.xpose.msra.mxu0 %v3400
      %3448 = vmatprep.subr.bf16.mxu0 0
      %3449 = vmatpush1.bf16.xpose.msra.mxu0 %v3403
      %3450 = vmatprep.subr.bf16.mxu0 0
      %3451 = vmatpush1.bf16.xpose.msra.mxu0 %v3406
      %3452 = vmatprep.subr.bf16.mxu0 0
      %3453 = vmatpush1.bf16.xpose.msra.mxu0 %v3409
      %3454 = vmatprep.subr.bf16.mxu0 0
      %3455 = vmatpush1.bf16.xpose.msra.mxu0 %v3412
      %3456 = vmatprep.subr.bf16.mxu0 0
      %3457 = vmatpush1.bf16.xpose.msra.mxu0 %v3415
      %3458 = vmatprep.subr.bf16.mxu0 0
      %3459 = vmatpush1.bf16.xpose.msra.mxu0 %v3418
      %3460 = vmatprep.subr.bf16.mxu0 0
      %3461 = vmatpush1.bf16.xpose.msra.mxu0 %v3421
      %3462 = vmatprep.subr.bf16.mxu0 0
      %3463 = vmatpush1.bf16.xpose.msra.mxu0 %v3424
      %3464 = vmatprep.subr.bf16.mxu0 0
      %3465 = vmatpush1.bf16.xpose.msra.mxu0 %v3427
      %3466 = vmatprep.subr.bf16.mxu0 0
      %3467 = vmatpush1.bf16.xpose.msra.mxu0 %v3430
      %3468 = vmatprep.subr.bf16.mxu0 0
      %3469 = vmatpush1.bf16.xpose.msra.mxu0 %v3433
      %3470 = vmatprep.subr.bf16.mxu0 0
      %3471 = vmatpush1.bf16.xpose.msra.mxu0 %v3436
      %3472 = vmatprep.subr.bf16.mxu0 0
      %3473 = vmatpush1.bf16.xpose.msra.mxu0 %v3439
      %3474 = vmatprep.subr.bf16.mxu0 0
      %3475 = vmatpush1.bf16.xpose.msra.mxu0 %v3442
      %3476 = vmatprep.mubr.bf16.mxu0 0
      %3477 = vmatmul.mubr.bf16.gmra.mrb[0].mxu0 %v3394
      %v3478 = vpop.f32.mrb[0].mxu0
      %v3479 = vadd.f32 %v3390, %v3478
      %v3480 = vpop.f32.mrb[0].mxu0
      %v3481 = vadd.f32 %v3390, %v3480
      %v3482 = vpop.f32.mrb[0].mxu0
      %v3483 = vpop.f32.mrb[0].mxu0
      %3484 = vdwg.mxu0
      %v3485 = vmax.f32 %v3479, 0.0
      %v3486 = vmax.f32 %v3481, 0.0
      %3487 = vst [vmem:[%s170] sm:$0xff] %v3485
      %3488 = vst [vmem:[%s170 + $0x8] sm:$0xff] %v3486
      %p3489 = scmp.lt.s32.totalorder %s14, 1
      %s3490 = scalar_select %p3489, %s14, 1
      %s3491 = smul.addr %s3490, 2
      %s3492 = smul.addr %s3491, 8
      %s3493 = scalar_lea.vmem %s3, %s3492
      // Predicated region
      $region33: #{conv_layer_forward.1} parent=31 // pred_check
        %p3494 = pneg %p100
      $region34: #{conv_layer_forward.1} parent=31 // pred_check_branch
        %3496 = sbr.rel (%p3494) target = $region36
      $region35: #{conv_layer_forward.1} parent=31 // pred_region
        _
      $region36: #{conv_layer_forward.1} parent=31 // pred_fallthru
        _
    $region32: #{conv_layer_forward.1} parent=5 // pred_fallthru
      _
    %p3497 = scmp.le.s32.totalorder 2, %s9
    // Predicated region
    $region37: #{conv_layer_forward.1} parent=5 // pred_check
      %p3498 = pneg %p3497
    $region38: #{conv_layer_forward.1} parent=5 // pred_check_branch
      %3500 = sbr.rel (%p3498) target = $region40
    $region39: #{conv_layer_forward.1} parent=5 // pred_region
      %s3501 = ssub.s32 %s9, 2
      // Predicated region
      $region41: #{conv_layer_forward.1} parent=39 // pred_check
        %p3502 = pneg %p106
      $region42: #{conv_layer_forward.1} parent=39 // pred_check_branch
        %3504 = sbr.rel (%p3502) target = $region44
      $region43: #{conv_layer_forward.1} parent=39 // pred_region
        %p3505 = scmp.lt.s32.totalorder %s15, 1
        %s3506 = scalar_select %p3505, %s15, 1
        %s3507 = smul.addr %s3506, 2
        %s3508 = smul.addr %s3507, 8
        %s3509 = scalar_lea.vmem %s3, %s3508
      $region44: #{conv_layer_forward.1} parent=39 // pred_fallthru
        _
    $region40: #{conv_layer_forward.1} parent=5 // pred_fallthru
      _
  $region6: #{conv_layer_forward.1} parent=0 // loop_footer
    %s13 = sadd.s32 1, %s9
  $region7: #{conv_layer_forward.1} parent=0 // loop_footer_branch
    %8 = sbr.rel target = $region3
  $region8: #{conv_layer_forward.1} parent=0 // loop_exit
    _

</llo_original>
